<compile_context>
chip_gen: v7x
topology: tpu7x:2x2x1
jax: 0.10.0
libtpu: 0.0.40
codegen_flags: <defaults>
</compile_context>

<pallas_src>
import functools
import math

import jax
import jax.numpy as jnp
import numpy as np
from jax.experimental import pallas as pl
from jax.experimental.pallas import tpu as pltpu


# ----------------------------- in-kernel helpers ----------------------------

def _shift_fwd(x, k):
    """out[..., i] = x[..., i-k]; zero-filled for i < k (k static)."""
    if k == 0:
        return x
    n = x.shape[-1]
    if k >= n:
        return jnp.zeros_like(x)
    pad = jnp.zeros(x.shape[:-1] + (k,), x.dtype)
    return jnp.concatenate([pad, x[..., : n - k]], axis=-1)


def _shift_back(x, k):
    """out[..., i] = x[..., i+k]; zero-filled for i >= n-k (k static)."""
    if k == 0:
        return x
    n = x.shape[-1]
    if k >= n:
        return jnp.zeros_like(x)
    pad = jnp.zeros(x.shape[:-1] + (k,), x.dtype)
    return jnp.concatenate([x[..., k:], pad], axis=-1)


def _prefix_sum_lanes(x):
    """Exact f32 inclusive prefix sum along lanes (log-step shift+add)."""
    n = x.shape[-1]
    s = x
    k = 1
    while k < n:
        s = s + _shift_fwd(s, k)
        k *= 2
    return s


def _expand_rows(x, reps):
    """(B, W) -> (B*reps, W); row r = x[r // reps] (static B, reps)."""
    b, w = x.shape
    parts = [jnp.broadcast_to(x[i:i + 1, :], (reps, w)) for i in range(b)]
    return parts[0] if b == 1 else jnp.concatenate(parts, axis=0)


def _frac(x):
    """x mod 1 for x >= 0 (floor-mod, matches torch's % 1)."""
    return x - jnp.floor(x)


# ------------------------------- Pallas kernel -------------------------------

def _sinegen_kernel(f0_ref, f0h_ref, lanes_ref, hscale_ref, rand_ref, z_ref,
                    sine_ref, noise_ref, carry_ref, *,
                    U, dim, ia, ib, wA, wB, sine_amp, noise_std, thr):
    t = pl.program_id(1)
    num_t = pl.num_programs(1)
    TL = f0_ref.shape[-1]
    two_pi_u = 2.0 * math.pi * float(U)

    @pl.when(t == 0)
    def _():
        carry_ref[...] = jnp.zeros_like(carry_ref)

    carry_old = carry_ref[...]                  # (RT, 1) wrapped running cumsum

    hscale = hscale_ref[...]                    # (RT, 1)  (harmonic+1)/samp_rate
    lanes = lanes_ref[...]                      # (2, TL)  host constants
    w = lanes[0:1, :]                           # (1, TL)  upsample offsets w_r
    r0 = lanes[1:2, :]                          # (1, TL)  1.0 at U-block starts
    lane = jax.lax.broadcasted_iota(jnp.int32, (1, TL), 1)

    f0 = f0_ref[...]                            # (BT, TL)
    f0_rows = _expand_rows(f0, dim)             # (RT, TL)
    uv_rows = (f0_rows > thr).astype(jnp.float32)

    # --- noise branch first (keeps the peak live set small) -------------------
    noise_amp = uv_rows * noise_std + (1.0 - uv_rows) * (sine_amp / 3.0)
    noise_ref[...] = (noise_amp * z_ref[...].astype(jnp.float32)
                      ).astype(noise_ref.dtype)

    # --- harmonic branch -------------------------------------------------------
    rad = _frac(f0_rows * hscale)               # (f0 * harm / sr) mod 1
    t0_mask = jnp.where(jnp.logical_and(lane == 0, t == 0), 1.0, 0.0)
    rad = rad + rand_ref[...] * t0_mask         # random initial phase at i == 0

    # Half-pixel downsample taps -> block value d[j], placed at U-block starts;
    # then an exact prefix sum gives cc[i] = C[i // U] (incl. the tile carry).
    d = wA * _shift_back(rad, ia)
    if wB != 0.0:
        d = d + wB * _shift_back(rad, ib)
    q = r0 * d
    cc = _prefix_sum_lanes(q) + carry_old       # (RT, TL)

    # d of the first block of the NEXT tile, from the two halo taps only;
    # zeroed at the global last tile (PyTorch right-edge clamp).
    f0h = f0h_ref[...]                          # (BT, 128)
    d_next = wA * _frac(_expand_rows(f0h[:, ia:ia + 1], dim) * hscale)
    if wB != 0.0:
        d_next = d_next + wB * _frac(_expand_rows(f0h[:, ib:ib + 1], dim) * hscale)
    d_next = jnp.where(t == num_t - 1, 0.0, d_next)

    # Linear upsample: phase[i] = 2*pi*U * (C[j] + w_r * delta),
    # delta = C[j+1]-C[j] for w_r >= 0 else C[j]-C[j-1]  (edge-clamped).
    cc_next = jnp.where(lane >= TL - U, cc + d_next, _shift_back(cc, U))
    cc_prev = jnp.where(lane < U,
                        jnp.where(t == 0, cc, carry_old),
                        _shift_fwd(cc, U))
    delta = jnp.where(w >= 0.0, cc_next - cc, cc - cc_prev)
    # The integer part of C is irrelevant for sin(2*pi*U*C) with integer U:
    # drop it so the sin argument stays small (precision independent of L).
    phase = two_pi_u * (_frac(cc) + w * delta)
    sines = jnp.sin(phase) * sine_amp

    # Wrapped carry to the next tile (integer shift of C is exact for the sin).
    carry_ref[...] = _frac(cc[:, TL - 1:TL])

    sine_ref[...] = (sines * uv_rows
                     + noise_ref[...].astype(jnp.float32)).astype(sine_ref.dtype)


# ----------------------------------- wrapper ---------------------------------

def _downsample_taps(U):
    src0 = 0.5 * U - 0.5                        # half-pixel source of block 0
    i0 = int(np.floor(src0))
    lam = float(src0 - i0)
    return i0, min(i0 + 1, U - 1), float(1.0 - lam), float(lam)


def _build_lane_consts(TL, U):
    i = np.arange(TL)
    r = i % U
    w = ((r + 0.5) / U - 0.5).astype(np.float32)
    r0 = (r == 0).astype(np.float32)
    return np.stack([w, r0], axis=0)            # (2, TL)


def _pick_time_tile(L, U, row_tile):
    base = (128 * U) // math.gcd(128, U)        # lcm(128, U)
    if L % base != 0:
        raise ValueError("L must be a multiple of lcm(128, upsample_scale)")
    # keep row_tile*TL f32 temporaries comfortably inside the scoped VMEM limit
    budget = max(base, min(L, 4096, (256 * 1024) // max(row_tile, 1)))
    tl, m = base, 2
    while base * m <= budget:
        if L % (base * m) == 0:
            tl = base * m
        m += 1
    return tl


def sine_gen_forward(f0, rand_ini, *, samp_rate, upsample_scale, harmonic_num=0,
                     sine_amp=0.1, noise_std=0.003, voiced_threshold=0.0,
                     noise_key=None, time_tile=None, batch_tile=None,
                     out_dtype=jnp.float32, channels_last=False):
    """SineGen forward (flag_for_pulse=False).

    f0: (B, L, 1) or (B, L); rand_ini: (B, harmonic_num+1) with column 0 == 0
    (the uniform random initial phases torch draws inside _f02sine).
    Returns (sine_waves, uv, noise) as (B, dim, L), (B, 1, L), (B, dim, L)
    (lane-dense TPU layout).  channels_last=True gives the torch (B, L, dim).
    batch_tile (< B) adds a "parallel" row-block grid axis (uses both
    TensorCores on v7x); the time axis stays "arbitrary" (sequential carry).
    """
    f0 = jnp.asarray(f0, jnp.float32)
    if f0.ndim == 3:
        f0 = f0[..., 0]
    B, L = f0.shape
    U = int(upsample_scale)
    dim = int(harmonic_num) + 1
    R = B * dim
    assert 1 <= U <= 128, "upsample_scale must be in [1, 128]"
    assert L % U == 0, "L must be divisible by upsample_scale"

    if batch_tile is None:
        batch_tile = B
    assert B % batch_tile == 0, "batch_tile must divide B"
    RB = B // batch_tile
    row_tile = batch_tile * dim

    if time_tile is None:
        time_tile = _pick_time_tile(L, U, row_tile)
    TL = int(time_tile)
    assert TL % 128 == 0 and TL % U == 0 and L % TL == 0, "bad time_tile"
    T = L // TL

    ia, ib, wA, wB = _downsample_taps(U)
    lanes_const = jnp.asarray(_build_lane_consts(TL, U))
    hscale = jnp.asarray(((np.arange(R) % dim + 1) / float(samp_rate))
                         .astype(np.float32).reshape(RB, row_tile, 1))
    rand3 = jnp.asarray(rand_ini, jnp.float32).reshape(RB, row_tile, 1)
    if noise_key is None:
        noise_key = jax.random.PRNGKey(0)
    z = jax.random.normal(noise_key, (RB, row_tile, L), dtype=jnp.float32)
    f0_3d = f0.reshape(RB, batch_tile, L)

    kernel = functools.partial(
        _sinegen_kernel, U=U, dim=dim, ia=ia, ib=ib, wA=wA, wB=wB,
        sine_amp=float(sine_amp), noise_std=float(noise_std),
        thr=float(voiced_threshold))

    tl_blocks = TL // 128
    halo_blocks = L // 128 - 1

    grid_spec = pltpu.PrefetchScalarGridSpec(
        num_scalar_prefetch=0,
        grid=(RB, T),
        in_specs=[
            pl.BlockSpec((None, batch_tile, TL), lambda rb, t: (rb, 0, t)),      # f0 tile
            pl.BlockSpec((None, batch_tile, 128),
                         lambda rb, t: (rb, 0, jnp.minimum((t + 1) * tl_blocks,
                                                           halo_blocks))),       # f0 halo
            pl.BlockSpec((2, TL), lambda rb, t: (0, 0)),                         # lane consts
            pl.BlockSpec((None, row_tile, 1), lambda rb, t: (rb, 0, 0)),         # harmonic/sr
            pl.BlockSpec((None, row_tile, 1), lambda rb, t: (rb, 0, 0)),         # rand_ini
            pl.BlockSpec((None, row_tile, TL), lambda rb, t: (rb, 0, t)),        # N(0,1) z
        ],
        out_specs=[
            pl.BlockSpec((None, row_tile, TL), lambda rb, t: (rb, 0, t)),        # sine
            pl.BlockSpec((None, row_tile, TL), lambda rb, t: (rb, 0, t)),        # noise
        ],
        scratch_shapes=[pltpu.VMEM((row_tile, 1), jnp.float32)],                 # cumsum carry
    )
    out_shape = (
        jax.ShapeDtypeStruct((RB, row_tile, L), out_dtype),
        jax.ShapeDtypeStruct((RB, row_tile, L), out_dtype),
    )
    sine3, noise3 = pl.pallas_call(
        kernel,
        out_shape=out_shape,
        grid_spec=grid_spec,
        compiler_params=pltpu.CompilerParams(
            dimension_semantics=("parallel", "arbitrary")),
    )(f0_3d, f0_3d, lanes_const, hscale, rand3, z)

    sine = sine3.reshape(B, dim, L)
    noise = noise3.reshape(B, dim, L)
    uv = (f0 > voiced_threshold).astype(out_dtype).reshape(B, 1, L)
    if channels_last:  # torch layout; costs an extra HBM pass - off by default
        sine = jnp.transpose(sine, (0, 2, 1))
        noise = jnp.transpose(noise, (0, 2, 1))
        uv = jnp.transpose(uv, (0, 2, 1))
    return sine, uv, noise


# --------------------------- float64 reference (test) ------------------------

def _ref_deterministic(f0, rand_ini, *, samp_rate, U, harmonic_num, sine_amp,
                       voiced_threshold):
    """Deterministic part sin(phase)*amp*uv of torch SineGen, in float64."""
    f0 = np.asarray(f0, np.float64)                     # (B, L)
    B, L = f0.shape
    dim = harmonic_num + 1
    harms = np.arange(1, dim + 1, dtype=np.float64)
    fn = f0[:, :, None] * harms[None, None, :]          # (B, L, dim)
    rad = np.mod(fn / samp_rate, 1.0)
    rad[:, 0, :] += np.asarray(rand_ini, np.float64)
    Ld = L // U
    rad_t = np.transpose(rad, (0, 2, 1))                # (B, dim, L)
    j = np.arange(Ld)
    src = (j + 0.5) * U - 0.5
    i0 = np.floor(src).astype(int)
    lam = src - i0
    i1 = np.minimum(i0 + 1, L - 1)
    d = rad_t[..., i0] * (1 - lam) + rad_t[..., i1] * lam
    phase = np.cumsum(d, axis=-1) * 2.0 * np.pi
    i = np.arange(L)
    src = np.maximum((i + 0.5) / U - 0.5, 0.0)
    j0 = np.floor(src).astype(int)
    lam = src - j0
    j1 = np.minimum(j0 + 1, Ld - 1)
    P = phase * U
    phase_up = P[..., j0] * (1 - lam) + P[..., j1] * lam
    sines = np.sin(phase_up) * sine_amp                 # (B, dim, L)
    uv = (f0 > voiced_threshold).astype(np.float64)     # (B, L)
    det = sines * uv[:, None, :]
    return det.astype(np.float32), uv.astype(np.float32)


# ------------------------------------ main ------------------------------------

if __name__ == "__main__":
    key = jax.random.PRNGKey(0)

    def run_case(case_key, *, B, L, U, harmonic_num, TL, batch_tile=None,
                 samp_rate=16000, sine_amp=0.1, noise_std=0.003, thr=0.0):
        dim = harmonic_num + 1
        k1, k2, k3, k4 = jax.random.split(case_key, 4)
        f0_vals = jax.random.uniform(k1, (B, L, 1), minval=80.0, maxval=300.0)
        voiced = (jax.random.uniform(k2, (B, L, 1)) > 0.3).astype(jnp.float32)
        f0 = f0_vals * voiced                           # unvoiced frames -> 0
        rand_ini = jax.random.uniform(k3, (B, dim)).at[:, 0].set(0.0)

        sine, uv, noise = sine_gen_forward(
            f0, rand_ini, samp_rate=samp_rate, upsample_scale=U,
            harmonic_num=harmonic_num, sine_amp=sine_amp, noise_std=noise_std,
            voiced_threshold=thr, noise_key=k4, time_tile=TL,
            batch_tile=batch_tile)
        jax.block_until_ready((sine, uv, noise))

        det_ref, uv_ref = _ref_deterministic(
            np.asarray(f0)[..., 0], np.asarray(rand_ini),
            samp_rate=samp_rate, U=U, harmonic_num=harmonic_num,
            sine_amp=sine_amp, voiced_threshold=thr)

        sine_np = np.asarray(sine)
        uv_np = np.asarray(uv)
        noise_np = np.asarray(noise)

        # 1) voiced/unvoiced mask is exact
        np.testing.assert_allclose(uv_np[:, 0, :], uv_ref, atol=1e-6)
        # 2) deterministic harmonic part matches the f64 reference
        np.testing.assert_allclose(sine_np - noise_np, det_ref, atol=2e-3, rtol=0)
        # 3) noise has the right amplitude envelope and ~N(0,1) statistics
        uv_rows = np.repeat(uv_ref[:, None, :], dim, axis=1)
        amp = np.where(uv_rows > 0, noise_std, sine_amp / 3.0)
        zhat = noise_np / amp
        assert 0.7 < zhat.std() < 1.3, f"noise std off: {zhat.std()}"
        assert abs(zhat.mean()) < 0.15, f"noise mean off: {zhat.mean()}"

    # multi-tile, even upsample factor, 8 harmonics, 2 parallel row blocks
    run_case(jax.random.fold_in(key, 0), B=2, L=1024, U=8, harmonic_num=7,
             TL=256, batch_tile=1)
    # single-tile, odd upsample factor, 4 harmonics, default (no row split)
    run_case(jax.random.fold_in(key, 1), B=1, L=640, U=5, harmonic_num=3, TL=640)

    print("KERNEL_OK")
</pallas_src>

<mosaic_0001>
module attributes {stable_mosaic.version = 11 : i64} {
  func.func @_sinegen_kernel(%arg0: i32, %arg1: i32, %arg2: memref<1x1x256xf32, #tpu.memory_space<vmem>>, %arg3: memref<1x1x128xf32, #tpu.memory_space<vmem>>, %arg4: memref<2x256xf32, #tpu.memory_space<vmem>>, %arg5: memref<1x8x1xf32, #tpu.memory_space<vmem>>, %arg6: memref<1x8x1xf32, #tpu.memory_space<vmem>>, %arg7: memref<1x8x256xf32, #tpu.memory_space<vmem>>, %arg8: memref<1x8x256xf32, #tpu.memory_space<vmem>>, %arg9: memref<1x8x256xf32, #tpu.memory_space<vmem>>, %arg10: memref<8x1xf32, #tpu.memory_space<vmem>>) attributes {dimension_semantics = [#tpu.dimension_semantics<parallel>, #tpu.dimension_semantics<arbitrary>], iteration_bounds = array<i64: 2, 4>, scalar_prefetch = 0 : i64, scratch_operands = 1 : i64, tpu.core_type = #tpu.core_type<tc>, window_params = [{transform_indices = @transform_0, window_bounds = array<i64: 1, 1, 256>}, {transform_indices = @transform_1, window_bounds = array<i64: 1, 1, 128>}, {pipeline_mode = #tpu.pipeline_mode<synchronous>, transform_indices = @transform_2, window_bounds = array<i64: 2, 256>}, {transform_indices = @transform_3, window_bounds = array<i64: 1, 8, 1>}, {transform_indices = @transform_4, window_bounds = array<i64: 1, 8, 1>}, {transform_indices = @transform_5, window_bounds = array<i64: 1, 8, 256>}, {transform_indices = @transform_6, window_bounds = array<i64: 1, 8, 256>}, {transform_indices = @transform_7, window_bounds = array<i64: 1, 8, 256>}]} {
    %c0_i32 = arith.constant 0 : i32
    %0 = arith.cmpi eq, %arg1, %c0_i32 : i32
    %1 = arith.extui %0 : i1 to i32
    %c0_i32_0 = arith.constant 0 : i32
    %2 = arith.cmpi ne, %1, %c0_i32_0 : i32
    scf.if %2 {
      %cst_58 = arith.constant 0.000000e+00 : f32
      %168 = vector.broadcast %cst_58 : f32 to vector<8x1xf32>
      %c0_59 = arith.constant 0 : index
      %c0_60 = arith.constant 0 : index
      %169 = vector.load %arg10[%c0_59, %c0_60] : memref<8x1xf32, #tpu.memory_space<vmem>>, vector<8x1xf32>
      tpu.vector_store %arg10[%c0_59, %c0_60], %168 {strides = array<i32>} : memref<8x1xf32, #tpu.memory_space<vmem>>, vector<8x1xf32>,
    } else {
    }
    %c0 = arith.constant 0 : index
    %c0_1 = arith.constant 0 : index
    %3 = vector.load %arg10[%c0, %c0_1] : memref<8x1xf32, #tpu.memory_space<vmem>>, vector<8x1xf32>
    %c0_2 = arith.constant 0 : index
    %c0_3 = arith.constant 0 : index
    %c0_4 = arith.constant 0 : index
    %4 = vector.load %arg5[%c0_2, %c0_3, %c0_4] : memref<1x8x1xf32, #tpu.memory_space<vmem>>, vector<1x8x1xf32>
    %5 = vector.shape_cast %4 : vector<1x8x1xf32> to vector<8x1xf32>
    %c0_5 = arith.constant 0 : index
    %c0_6 = arith.constant 0 : index
    %6 = vector.load %arg4[%c0_5, %c0_6] : memref<2x256xf32, #tpu.memory_space<vmem>>, vector<2x256xf32>
    %7 = vector.extract_strided_slice %6 {offsets = [0, 0], sizes = [1, 256], strides = [1, 1]} : vector<2x256xf32> to vector<1x256xf32>
    %8 = vector.extract_strided_slice %6 {offsets = [1, 0], sizes = [1, 256], strides = [1, 1]} : vector<2x256xf32> to vector<1x256xf32>
    %9 = tpu.iota {dimensions = array<i32: 1>} : vector<1x256xi32>
    %c0_7 = arith.constant 0 : index
    %c0_8 = arith.constant 0 : index
    %c0_9 = arith.constant 0 : index
    %10 = vector.load %arg2[%c0_7, %c0_8, %c0_9] : memref<1x1x256xf32, #tpu.memory_space<vmem>>, vector<1x1x256xf32>
    %11 = vector.shape_cast %10 : vector<1x1x256xf32> to vector<1x256xf32>
    %12 = vector.shape_cast %11 : vector<1x256xf32> to vector<1x256xf32>
    %13 = vector.broadcast %12 : vector<1x256xf32> to vector<8x256xf32>
    %cst = arith.constant 0.000000e+00 : f32
    %14 = vector.broadcast %cst : f32 to vector<8x256xf32>
    %15 = arith.cmpf ogt, %13, %14 : vector<8x256xf32>
    %16 = arith.extui %15 : vector<8x256xi1> to vector<8x256xi32>
    %17 = arith.sitofp %16 : vector<8x256xi32> to vector<8x256xf32>
    %cst_10 = arith.constant 3.000000e-03 : f32
    %18 = vector.broadcast %cst_10 : f32 to vector<8x256xf32>
    %19 = arith.mulf %17, %18 : vector<8x256xf32>
    %cst_11 = arith.constant 1.000000e+00 : f32
    %20 = vector.broadcast %cst_11 : f32 to vector<8x256xf32>
    %21 = arith.subf %20, %17 : vector<8x256xf32>
    %cst_12 = arith.constant 0.0333333351 : f32
    %22 = vector.broadcast %cst_12 : f32 to vector<8x256xf32>
    %23 = arith.mulf %21, %22 : vector<8x256xf32>
    %24 = arith.addf %19, %23 : vector<8x256xf32>
    %c0_13 = arith.constant 0 : index
    %c0_14 = arith.constant 0 : index
    %c0_15 = arith.constant 0 : index
    %25 = vector.load %arg7[%c0_13, %c0_14, %c0_15] : memref<1x8x256xf32, #tpu.memory_space<vmem>>, vector<1x8x256xf32>
    %26 = vector.shape_cast %25 : vector<1x8x256xf32> to vector<8x256xf32>
    %27 = arith.mulf %24, %26 : vector<8x256xf32>
    %c0_16 = arith.constant 0 : index
    %c0_17 = arith.constant 0 : index
    %c0_18 = arith.constant 0 : index
    %28 = vector.load %arg9[%c0_16, %c0_17, %c0_18] : memref<1x8x256xf32, #tpu.memory_space<vmem>>, vector<1x8x256xf32>
    %29 = vector.shape_cast %28 : vector<1x8x256xf32> to vector<8x256xf32>
    %30 = vector.shape_cast %27 : vector<8x256xf32> to vector<1x8x256xf32>
    tpu.vector_store %arg9[%c0_16, %c0_17, %c0_18], %30 {strides = array<i32>} : memref<1x8x256xf32, #tpu.memory_space<vmem>>, vector<1x8x256xf32>,
    %31 = vector.broadcast %5 : vector<8x1xf32> to vector<8x256xf32>
    %32 = arith.mulf %13, %31 : vector<8x256xf32>
    %33 = math.floor %32 : vector<8x256xf32>
    %34 = arith.subf %32, %33 : vector<8x256xf32>
    %c0_i32_19 = arith.constant 0 : i32
    %35 = vector.broadcast %c0_i32_19 : i32 to vector<1x256xi32>
    %36 = arith.cmpi eq, %9, %35 : vector<1x256xi32>
    %c0_i32_20 = arith.constant 0 : i32
    %37 = arith.cmpi eq, %arg1, %c0_i32_20 : i32
    %38 = vector.broadcast %37 : i1 to vector<1x256xi1>
    %39 = arith.andi %36, %38 : vector<1x256xi1>
    %cst_21 = arith.constant 1.000000e+00 : f32
    %cst_22 = arith.constant 0.000000e+00 : f32
    %40 = vector.broadcast %cst_21 : f32 to vector<1x256xf32>
    %41 = vector.broadcast %cst_22 : f32 to vector<1x256xf32>
    %42 = arith.select %39, %40, %41 : vector<1x256xi1>, vector<1x256xf32>
    %c0_23 = arith.constant 0 : index
    %c0_24 = arith.constant 0 : index
    %c0_25 = arith.constant 0 : index
    %43 = vector.load %arg6[%c0_23, %c0_24, %c0_25] : memref<1x8x1xf32, #tpu.memory_space<vmem>>, vector<1x8x1xf32>
    %44 = vector.shape_cast %43 : vector<1x8x1xf32> to vector<8x1xf32>
    %45 = vector.broadcast %44 : vector<8x1xf32> to vector<8x256xf32>
    %46 = vector.broadcast %42 : vector<1x256xf32> to vector<8x256xf32>
    %47 = arith.mulf %45, %46 : vector<8x256xf32>
    %48 = arith.addf %34, %47 : vector<8x256xf32>
    %cst_26 = arith.constant 0.000000e+00 : f32
    %49 = vector.broadcast %cst_26 : f32 to vector<8x3xf32>
    %50 = vector.extract_strided_slice %48 {offsets = [0, 3], sizes = [8, 253], strides = [1, 1]} : vector<8x256xf32> to vector<8x253xf32>
    %51 = tpu.concatenate %50, %49 in 1 : vector<8x253xf32>, vector<8x3xf32> -> vector<8x256xf32>
    %cst_27 = arith.constant 5.000000e-01 : f32
    %52 = vector.broadcast %cst_27 : f32 to vector<8x256xf32>
    %53 = arith.mulf %52, %51 : vector<8x256xf32>
    %cst_28 = arith.constant 0.000000e+00 : f32
    %54 = vector.broadcast %cst_28 : f32 to vector<8x4xf32>
    %55 = vector.extract_strided_slice %48 {offsets = [0, 4], sizes = [8, 252], strides = [1, 1]} : vector<8x256xf32> to vector<8x252xf32>
    %56 = tpu.concatenate %55, %54 in 1 : vector<8x252xf32>, vector<8x4xf32> -> vector<8x256xf32>
    %cst_29 = arith.constant 5.000000e-01 : f32
    %57 = vector.broadcast %cst_29 : f32 to vector<8x256xf32>
    %58 = arith.mulf %57, %56 : vector<8x256xf32>
    %59 = arith.addf %53, %58 : vector<8x256xf32>
    %60 = vector.broadcast %8 : vector<1x256xf32> to vector<8x256xf32>
    %61 = arith.mulf %60, %59 : vector<8x256xf32>
    %cst_30 = arith.constant 0.000000e+00 : f32
    %62 = vector.broadcast %cst_30 : f32 to vector<8x1xf32>
    %63 = vector.extract_strided_slice %61 {offsets = [0, 0], sizes = [8, 255], strides = [1, 1]} : vector<8x256xf32> to vector<8x255xf32>
    %64 = tpu.concatenate %62, %63 in 1 : vector<8x1xf32>, vector<8x255xf32> -> vector<8x256xf32>
    %65 = arith.addf %61, %64 : vector<8x256xf32>
    %cst_31 = arith.constant 0.000000e+00 : f32
    %66 = vector.broadcast %cst_31 : f32 to vector<8x2xf32>
    %67 = vector.extract_strided_slice %65 {offsets = [0, 0], sizes = [8, 254], strides = [1, 1]} : vector<8x256xf32> to vector<8x254xf32>
    %68 = tpu.concatenate %66, %67 in 1 : vector<8x2xf32>, vector<8x254xf32> -> vector<8x256xf32>
    %69 = arith.addf %65, %68 : vector<8x256xf32>
    %cst_32 = arith.constant 0.000000e+00 : f32
    %70 = vector.broadcast %cst_32 : f32 to vector<8x4xf32>
    %71 = vector.extract_strided_slice %69 {offsets = [0, 0], sizes = [8, 252], strides = [1, 1]} : vector<8x256xf32> to vector<8x252xf32>
    %72 = tpu.concatenate %70, %71 in 1 : vector<8x4xf32>, vector<8x252xf32> -> vector<8x256xf32>
    %73 = arith.addf %69, %72 : vector<8x256xf32>
    %cst_33 = arith.constant 0.000000e+00 : f32
    %74 = vector.broadcast %cst_33 : f32 to vector<8x8xf32>
    %75 = vector.extract_strided_slice %73 {offsets = [0, 0], sizes = [8, 248], strides = [1, 1]} : vector<8x256xf32> to vector<8x248xf32>
    %76 = tpu.concatenate %74, %75 in 1 : vector<8x8xf32>, vector<8x248xf32> -> vector<8x256xf32>
    %77 = arith.addf %73, %76 : vector<8x256xf32>
    %cst_34 = arith.constant 0.000000e+00 : f32
    %78 = vector.broadcast %cst_34 : f32 to vector<8x16xf32>
    %79 = vector.extract_strided_slice %77 {offsets = [0, 0], sizes = [8, 240], strides = [1, 1]} : vector<8x256xf32> to vector<8x240xf32>
    %80 = tpu.concatenate %78, %79 in 1 : vector<8x16xf32>, vector<8x240xf32> -> vector<8x256xf32>
    %81 = arith.addf %77, %80 : vector<8x256xf32>
    %cst_35 = arith.constant 0.000000e+00 : f32
    %82 = vector.broadcast %cst_35 : f32 to vector<8x32xf32>
    %83 = vector.extract_strided_slice %81 {offsets = [0, 0], sizes = [8, 224], strides = [1, 1]} : vector<8x256xf32> to vector<8x224xf32>
    %84 = tpu.concatenate %82, %83 in 1 : vector<8x32xf32>, vector<8x224xf32> -> vector<8x256xf32>
    %85 = arith.addf %81, %84 : vector<8x256xf32>
    %cst_36 = arith.constant 0.000000e+00 : f32
    %86 = vector.broadcast %cst_36 : f32 to vector<8x64xf32>
    %87 = vector.extract_strided_slice %85 {offsets = [0, 0], sizes = [8, 192], strides = [1, 1]} : vector<8x256xf32> to vector<8x192xf32>
    %88 = tpu.concatenate %86, %87 in 1 : vector<8x64xf32>, vector<8x192xf32> -> vector<8x256xf32>
    %89 = arith.addf %85, %88 : vector<8x256xf32>
    %cst_37 = arith.constant 0.000000e+00 : f32
    %90 = vector.broadcast %cst_37 : f32 to vector<8x128xf32>
    %91 = vector.extract_strided_slice %89 {offsets = [0, 0], sizes = [8, 128], strides = [1, 1]} : vector<8x256xf32> to vector<8x128xf32>
    %92 = tpu.concatenate %90, %91 in 1 : vector<8x128xf32>, vector<8x128xf32> -> vector<8x256xf32>
    %93 = arith.addf %89, %92 : vector<8x256xf32>
    %94 = vector.broadcast %3 : vector<8x1xf32> to vector<8x256xf32>
    %95 = arith.addf %93, %94 : vector<8x256xf32>
    %c0_38 = arith.constant 0 : index
    %c0_39 = arith.constant 0 : index
    %c0_40 = arith.constant 0 : index
    %96 = vector.load %arg3[%c0_38, %c0_39, %c0_40] : memref<1x1x128xf32, #tpu.memory_space<vmem>>, vector<1x1x128xf32>
    %97 = vector.shape_cast %96 : vector<1x1x128xf32> to vector<1x128xf32>
    %98 = vector.extract_strided_slice %97 {offsets = [0, 3], sizes = [1, 1], strides = [1, 1]} : vector<1x128xf32> to vector<1x1xf32>
    %99 = vector.shape_cast %98 : vector<1x1xf32> to vector<1x1xf32>
    %100 = vector.broadcast %99 : vector<1x1xf32> to vector<8x1xf32>
    %101 = arith.mulf %100, %5 : vector<8x1xf32>
    %102 = math.floor %101 : vector<8x1xf32>
    %103 = arith.subf %101, %102 : vector<8x1xf32>
    %cst_41 = arith.constant 5.000000e-01 : f32
    %104 = vector.broadcast %cst_41 : f32 to vector<8x1xf32>
    %105 = arith.mulf %104, %103 : vector<8x1xf32>
    %106 = vector.extract_strided_slice %97 {offsets = [0, 4], sizes = [1, 1], strides = [1, 1]} : vector<1x128xf32> to vector<1x1xf32>
    %107 = vector.shape_cast %106 : vector<1x1xf32> to vector<1x1xf32>
    %108 = vector.broadcast %107 : vector<1x1xf32> to vector<8x1xf32>
    %109 = arith.mulf %108, %5 : vector<8x1xf32>
    %110 = math.floor %109 : vector<8x1xf32>
    %111 = arith.subf %109, %110 : vector<8x1xf32>
    %cst_42 = arith.constant 5.000000e-01 : f32
    %112 = vector.broadcast %cst_42 : f32 to vector<8x1xf32>
    %113 = arith.mulf %112, %111 : vector<8x1xf32>
    %114 = arith.addf %105, %113 : vector<8x1xf32>
    %c3_i32 = arith.constant 3 : i32
    %115 = arith.cmpi eq, %arg1, %c3_i32 : i32
    %cst_43 = arith.constant 0.000000e+00 : f32
    %116 = vector.broadcast %cst_43 : f32 to vector<8x1xf32>
    %117 = arith.select %115, %116, %114 : vector<8x1xf32>
    %c248_i32 = arith.constant 248 : i32
    %118 = vector.broadcast %c248_i32 : i32 to vector<1x256xi32>
    %119 = arith.cmpi sge, %9, %118 : vector<1x256xi32>
    %120 = vector.broadcast %117 : vector<8x1xf32> to vector<8x256xf32>
    %121 = arith.addf %95, %120 : vector<8x256xf32>
    %cst_44 = arith.constant 0.000000e+00 : f32
    %122 = vector.broadcast %cst_44 : f32 to vector<8x8xf32>
    %123 = vector.extract_strided_slice %95 {offsets = [0, 8], sizes = [8, 248], strides = [1, 1]} : vector<8x256xf32> to vector<8x248xf32>
    %124 = tpu.concatenate %123, %122 in 1 : vector<8x248xf32>, vector<8x8xf32> -> vector<8x256xf32>
    %125 = vector.shape_cast %119 : vector<1x256xi1> to vector<1x256xi1>
    %126 = vector.broadcast %125 : vector<1x256xi1> to vector<8x256xi1>
    %127 = arith.select %126, %121, %124 : vector<8x256xi1>, vector<8x256xf32>
    %c8_i32 = arith.constant 8 : i32
    %128 = vector.broadcast %c8_i32 : i32 to vector<1x256xi32>
    %129 = arith.cmpi slt, %9, %128 : vector<1x256xi32>
    %c0_i32_45 = arith.constant 0 : i32
    %130 = arith.cmpi eq, %arg1, %c0_i32_45 : i32
    %131 = vector.shape_cast %3 : vector<8x1xf32> to vector<8x1xf32>
    %132 = vector.broadcast %131 : vector<8x1xf32> to vector<8x256xf32>
    %133 = arith.select %130, %95, %132 : vector<8x256xf32>
    %cst_46 = arith.constant 0.000000e+00 : f32
    %134 = vector.broadcast %cst_46 : f32 to vector<8x8xf32>
    %135 = vector.extract_strided_slice %95 {offsets = [0, 0], sizes = [8, 248], strides = [1, 1]} : vector<8x256xf32> to vector<8x248xf32>
    %136 = tpu.concatenate %134, %135 in 1 : vector<8x8xf32>, vector<8x248xf32> -> vector<8x256xf32>
    %137 = vector.shape_cast %129 : vector<1x256xi1> to vector<1x256xi1>
    %138 = vector.broadcast %137 : vector<1x256xi1> to vector<8x256xi1>
    %139 = arith.select %138, %133, %136 : vector<8x256xi1>, vector<8x256xf32>
    %cst_47 = arith.constant 0.000000e+00 : f32
    %140 = vector.broadcast %cst_47 : f32 to vector<1x256xf32>
    %141 = arith.cmpf oge, %7, %140 : vector<1x256xf32>
    %142 = arith.subf %127, %95 : vector<8x256xf32>
    %143 = arith.subf %95, %139 : vector<8x256xf32>
    %144 = vector.shape_cast %141 : vector<1x256xi1> to vector<1x256xi1>
    %145 = vector.broadcast %144 : vector<1x256xi1> to vector<8x256xi1>
    %146 = arith.select %145, %142, %143 : vector<8x256xi1>, vector<8x256xf32>
    %147 = math.floor %95 : vector<8x256xf32>
    %148 = arith.subf %95, %147 : vector<8x256xf32>
    %149 = vector.broadcast %7 : vector<1x256xf32> to vector<8x256xf32>
    %150 = arith.mulf %149, %146 : vector<8x256xf32>
    %151 = arith.addf %148, %150 : vector<8x256xf32>
    %cst_48 = arith.constant 50.2654839 : f32
    %152 = vector.broadcast %cst_48 : f32 to vector<8x256xf32>
    %153 = arith.mulf %152, %151 : vector<8x256xf32>
    %154 = math.sin %153 : vector<8x256xf32>
    %cst_49 = arith.constant 1.000000e-01 : f32
    %155 = vector.broadcast %cst_49 : f32 to vector<8x256xf32>
    %156 = arith.mulf %154, %155 : vector<8x256xf32>
    %157 = vector.extract_strided_slice %95 {offsets = [0, 255], sizes = [8, 1], strides = [1, 1]} : vector<8x256xf32> to vector<8x1xf32>
    %158 = math.floor %157 : vector<8x1xf32>
    %159 = arith.subf %157, %158 : vector<8x1xf32>
    %c0_50 = arith.constant 0 : index
    %c0_51 = arith.constant 0 : index
    %160 = vector.load %arg10[%c0_50, %c0_51] : memref<8x1xf32, #tpu.memory_space<vmem>>, vector<8x1xf32>
    tpu.vector_store %arg10[%c0_50, %c0_51], %159 {strides = array<i32>} : memref<8x1xf32, #tpu.memory_space<vmem>>, vector<8x1xf32>,
    %161 = arith.mulf %156, %17 : vector<8x256xf32>
    %c0_52 = arith.constant 0 : index
    %c0_53 = arith.constant 0 : index
    %c0_54 = arith.constant 0 : index
    %162 = vector.load %arg9[%c0_52, %c0_53, %c0_54] : memref<1x8x256xf32, #tpu.memory_space<vmem>>, vector<1x8x256xf32>
    %163 = vector.shape_cast %162 : vector<1x8x256xf32> to vector<8x256xf32>
    %164 = arith.addf %161, %163 : vector<8x256xf32>
    %c0_55 = arith.constant 0 : index
    %c0_56 = arith.constant 0 : index
    %c0_57 = arith.constant 0 : index
    %165 = vector.load %arg8[%c0_55, %c0_56, %c0_57] : memref<1x8x256xf32, #tpu.memory_space<vmem>>, vector<1x8x256xf32>
    %166 = vector.shape_cast %165 : vector<1x8x256xf32> to vector<8x256xf32>
    %167 = vector.shape_cast %164 : vector<8x256xf32> to vector<1x8x256xf32>
    tpu.vector_store %arg8[%c0_55, %c0_56, %c0_57], %167 {strides = array<i32>} : memref<1x8x256xf32, #tpu.memory_space<vmem>>, vector<1x8x256xf32>,
    return
  }
  func.func @transform_0(%arg0: i32, %arg1: i32) -> (i32, i32, i32) {
    %c0_i32 = arith.constant 0 : i32
    %c0_i32_0 = arith.constant 0 : i32
    return %arg0, %c0_i32, %arg1 : i32, i32, i32
  }
  func.func @transform_1(%arg0: i32, %arg1: i32) -> (i32, i32, i32) {
    %c1_i32 = arith.constant 1 : i32
    %0 = arith.addi %arg1, %c1_i32 : i32
    %c2_i32 = arith.constant 2 : i32
    %1 = arith.muli %0, %c2_i32 : i32
    %c7_i32 = arith.constant 7 : i32
    %2 = arith.minsi %1, %c7_i32 : i32
    %c0_i32 = arith.constant 0 : i32
    %c0_i32_0 = arith.constant 0 : i32
    return %arg0, %c0_i32, %2 : i32, i32, i32
  }
  func.func @transform_2(%arg0: i32, %arg1: i32) -> (i32, i32) {
    %c0_i32 = arith.constant 0 : i32
    %c0_i32_0 = arith.constant 0 : i32
    %c0_i32_1 = arith.constant 0 : i32
    return %c0_i32, %c0_i32_0 : i32, i32
  }
  func.func @transform_3(%arg0: i32, %arg1: i32) -> (i32, i32, i32) {
    %c0_i32 = arith.constant 0 : i32
    %c0_i32_0 = arith.constant 0 : i32
    %c0_i32_1 = arith.constant 0 : i32
    return %arg0, %c0_i32, %c0_i32_0 : i32, i32, i32
  }
  func.func @transform_4(%arg0: i32, %arg1: i32) -> (i32, i32, i32) {
    %c0_i32 = arith.constant 0 : i32
    %c0_i32_0 = arith.constant 0 : i32
    %c0_i32_1 = arith.constant 0 : i32
    return %arg0, %c0_i32, %c0_i32_0 : i32, i32, i32
  }
  func.func @transform_5(%arg0: i32, %arg1: i32) -> (i32, i32, i32) {
    %c0_i32 = arith.constant 0 : i32
    %c0_i32_0 = arith.constant 0 : i32
    return %arg0, %c0_i32, %arg1 : i32, i32, i32
  }
  func.func @transform_6(%arg0: i32, %arg1: i32) -> (i32, i32, i32) {
    %c0_i32 = arith.constant 0 : i32
    %c0_i32_0 = arith.constant 0 : i32
    return %arg0, %c0_i32, %arg1 : i32, i32, i32
  }
  func.func @transform_7(%arg0: i32, %arg1: i32) -> (i32, i32, i32) {
    %c0_i32 = arith.constant 0 : i32
    %c0_i32_0 = arith.constant 0 : i32
    return %arg0, %c0_i32, %arg1 : i32, i32, i32
  }
}

</mosaic_0001>

<llo_original>
// kernel: tpu_custom_call.1
$region0: #{tpu_custom_call.1}
  #allocation0 [shape = 'u32[]', space=smem, size = 0x4, offset = 0x4, fixed_abs, tag = 'smem constant byte address 0x4 - core index']
  #allocation1 [shape = 'u32[144,128]{1,0:T(1,128)}', space=vmem, size = 0x12000, scoped, tag = 'internal scratch']
  #allocation2 [shape = 'f32[8,1]{1,0:T(8,128)}', space=vmem, size = 0x1000, scoped, tag = 'scratch operand']
  %s0 = inlined_call_operand.vmem [shape: f32[2,1,1024], index: 0, kind: input, shape index: {}]
  %s1 = inlined_call_operand.vmem [shape: f32[2,1,1024], index: 1, kind: input, shape index: {}]
  %s2 = inlined_call_operand.vmem [shape: f32[2,256], index: 2, kind: input, shape index: {}]
  %s3 = inlined_call_operand.vmem [shape: f32[2,8,1], index: 3, kind: input, shape index: {}]
  %s4 = inlined_call_operand.vmem [shape: f32[2,8,1], index: 4, kind: input, shape index: {}]
  %s5 = inlined_call_operand.hbm [shape: f32[2,8,1024], index: 5, kind: input, shape index: {}]
  %s6 = inlined_call_operand.hbm [shape: f32[2,8,1024], index: 6, kind: output, shape index: {0}]
  %s7 = inlined_call_operand.hbm [shape: f32[2,8,1024], index: 7, kind: output, shape index: {1}]
  %8 = xla_tuple %s6, %s7
  %s9 = sld [smem:[#allocation0]]
  $region73: #{tpu_custom_call.1} parent=0
    _
  %s11 = ssub.s32 1, %s9
  %s12 = scalar_select 0, %s11, %s9
  $region1: #{tpu_custom_call.1} parent=0
    #allocation3 [shape = 'u8[16384]{0}', space=vmem, size = 0x4000, scoped, tag = 'input window, operand 5']
    #allocation4 [shape = 's32[2]{0}', space=sflag, size = 0x8, scoped, tag = 'scoped memory for tpu_custom_call.1']
    #allocation5 [shape = 's32[2]{0}', space=sflag, size = 0x8, scoped, tag = 'scoped memory for tpu_custom_call.1']
    #allocation6 [shape = 'u8[16384]{0}', space=vmem, size = 0x4000, scoped, tag = 'output window, operand 0']
    #allocation7 [shape = 'u8[16384]{0}', space=vmem, size = 0x4000, scoped, tag = 'output window, operand 1']
    #allocation8 [shape = 's32[2]{0}', space=sflag, size = 0x8, scoped, tag = 'scoped memory for tpu_custom_call.1']
    %13 = vsyncpa [#allocation4], 0
    %s14 = scalar_lea.sflag [#allocation4], 1
    %15 = vsyncpa %s14, 0
    %16 = vsyncpa [#allocation5], 0
    %s17 = scalar_lea.sflag [#allocation5], 1
    %18 = vsyncpa %s17, 0
    %19 = vsyncpa [#allocation8], 0
    %s20 = scalar_lea.sflag [#allocation8], 1
    %21 = vsyncpa %s20, 0
    loop: start=0, step=1, limit=10
    $region2: #{tpu_custom_call.1} parent=1 // loop_pre_header
      _
    $region3: #{tpu_custom_call.1} parent=1 // loop_header
      %s23 = sphi 0, %s27
      %p24 = scmp.ge.s32.totalorder %s23, 10
      %s30 = sphi 0, %s42
      %s31 = sphi 0, %s38
      %s32 = sphi 0, %s30
      %s33 = sphi 0, %s31
      %s34 = sphi 0, %s32
      %s35 = sphi 0, %s33
      %s47 = sphi 0, %s49
      %s50 = sphi 0, %s47
      %s51 = sphi 0, %s50
      %s67 = sphi 0, %s51
      %s83 = sphi 0, %s85
      %s86 = sphi 0, %s83
      %s87 = sphi 0, %s86
      %s103 = sphi 0, %s87
      %s107 = sphi 0, %s107
      %s109 = sphi 0, %s107
      %s110 = sphi 0, %s109
      %s124 = sphi 0, %s110
      %s130 = sphi 0, %s132
      %s133 = sphi 0, %s130
      %s134 = sphi 0, %s133
      %s150 = sphi 0, %s134
      %s156 = sphi 0, %s158
      %s159 = sphi 0, %s156
      %s160 = sphi 0, %s159
      %s176 = sphi 0, %s160
      %s184 = sphi 0, %s186
      %s187 = sphi 0, %s184
      %s188 = sphi 0, %s187
      %s204 = sphi 0, %s188
      %s212 = sphi 0, %s214
      %s215 = sphi 0, %s212
      %s216 = sphi 0, %s215
      %s232 = sphi 0, %s216
      %s240 = sphi 0, %s242
      %s243 = sphi 0, %s240
      %s244 = sphi 0, %s243
      %s260 = sphi 0, %s244
    $region4: #{tpu_custom_call.1} parent=1 // loop_header_branch
      %26 = sbr.rel (%p24) target = $region8
    $region5: #{tpu_custom_call.1} parent=1 // loop_body
      %s28 = ssub.s32 %s23, 1
      %s29 = ssub.s32 %s23, 2
      %s36 = sadd.s32 1, %s31
      %p37 = scmp.ge.s32.totalorder %s36, 4
      %s38 = scalar_select %p37, 0, %s36
      %s39 = sadd.s32 1, %s30
      %s40 = scalar_select %p37, %s39, %s30
      %p41 = scmp.ge.s32.totalorder %s40, 2
      %s42 = scalar_select %p41, 0, %s40
      %s43 = ssub.s32 %s30, %s42
      %s44 = ssub.s32 %s31, %s38
      %s45 = sor.u32 %s43, %s44
      %p46 = scmp.eq.s32.totalorder %s45, 0
      %s48 = sadd.s32 %s47, 1
      %s49 = scalar_select %p46, %s47, %s48
      %p52 = pneg %p46
      %p53 = scmp.eq.s32.totalorder %s23, 7
      %p54 = por %p52, %p53
      %p55 = scmp.ne.s32.totalorder %s47, %s50
      %p56 = scmp.eq.s32.totalorder %s23, 0
      %p57 = por %p55, %p56
      %p58 = scmp.ne.s32.totalorder %s47, %s50
      %p59 = scmp.eq.s32.totalorder %s28, 7
      %p60 = por %p58, %p59
      %p61 = scmp.ne.s32.totalorder %s50, %s51
      %p62 = scmp.eq.s32.totalorder %s28, 0
      %p63 = por %p61, %p62
      %p64 = scmp.ne.s32.totalorder %s50, %s51
      %p65 = scmp.eq.s32.totalorder %s29, 7
      %p66 = por %p64, %p65
      %p68 = scmp.ne.s32.totalorder %s51, %s67
      %p69 = scmp.eq.s32.totalorder %s29, 0
      %p70 = por %p68, %p69
      %s71 = sadd.s32 %s31, 1
      %s72 = smul.u32 %s71, 2
      %p73 = scmp.lt.s32.totalorder %s72, 7
      %s74 = scalar_select %p73, %s72, 7
      %s75 = sadd.s32 %s38, 1
      %s76 = smul.u32 %s75, 2
      %p77 = scmp.lt.s32.totalorder %s76, 7
      %s78 = scalar_select %p77, %s76, 7
      %s79 = ssub.s32 %s30, %s42
      %s80 = ssub.s32 %s74, %s78
      %s81 = sor.u32 %s79, %s80
      %p82 = scmp.eq.s32.totalorder %s81, 0
      %s84 = sadd.s32 %s83, 1
      %s85 = scalar_select %p82, %s83, %s84
      %p88 = pneg %p82
      %p89 = scmp.eq.s32.totalorder %s23, 7
      %p90 = por %p88, %p89
      %p91 = scmp.ne.s32.totalorder %s83, %s86
      %p92 = scmp.eq.s32.totalorder %s23, 0
      %p93 = por %p91, %p92
      %p94 = scmp.ne.s32.totalorder %s83, %s86
      %p95 = scmp.eq.s32.totalorder %s28, 7
      %p96 = por %p94, %p95
      %p97 = scmp.ne.s32.totalorder %s86, %s87
      %p98 = scmp.eq.s32.totalorder %s28, 0
      %p99 = por %p97, %p98
      %p100 = scmp.ne.s32.totalorder %s86, %s87
      %p101 = scmp.eq.s32.totalorder %s29, 7
      %p102 = por %p100, %p101
      %p104 = scmp.ne.s32.totalorder %s87, %s103
      %p105 = scmp.eq.s32.totalorder %s29, 0
      %p106 = por %p104, %p105
      %s108 = sadd.s32 %s107, 1
      %p111 = scmp.eq.s32.totalorder %s23, 7
      %p112 = scmp.ne.s32.totalorder %s107, %s109
      %p113 = scmp.eq.s32.totalorder %s23, 0
      %p114 = por %p112, %p113
      %p115 = scmp.ne.s32.totalorder %s107, %s109
      %p116 = scmp.eq.s32.totalorder %s28, 7
      %p117 = por %p115, %p116
      %p118 = scmp.ne.s32.totalorder %s109, %s110
      %p119 = scmp.eq.s32.totalorder %s28, 0
      %p120 = por %p118, %p119
      %p121 = scmp.ne.s32.totalorder %s109, %s110
      %p122 = scmp.eq.s32.totalorder %s29, 7
      %p123 = por %p121, %p122
      %p125 = scmp.ne.s32.totalorder %s110, %s124
      %p126 = scmp.eq.s32.totalorder %s29, 0
      %p127 = por %p125, %p126
      %s128 = ssub.s32 %s30, %s42
      %p129 = scmp.eq.s32.totalorder %s128, 0
      %s131 = sadd.s32 %s130, 1
      %s132 = scalar_select %p129, %s130, %s131
      %p135 = pneg %p129
      %p136 = scmp.eq.s32.totalorder %s23, 7
      %p137 = por %p135, %p136
      %p138 = scmp.ne.s32.totalorder %s130, %s133
      %p139 = scmp.eq.s32.totalorder %s23, 0
      %p140 = por %p138, %p139
      %p141 = scmp.ne.s32.totalorder %s130, %s133
      %p142 = scmp.eq.s32.totalorder %s28, 7
      %p143 = por %p141, %p142
      %p144 = scmp.ne.s32.totalorder %s133, %s134
      %p145 = scmp.eq.s32.totalorder %s28, 0
      %p146 = por %p144, %p145
      %p147 = scmp.ne.s32.totalorder %s133, %s134
      %p148 = scmp.eq.s32.totalorder %s29, 7
      %p149 = por %p147, %p148
      %p151 = scmp.ne.s32.totalorder %s134, %s150
      %p152 = scmp.eq.s32.totalorder %s29, 0
      %p153 = por %p151, %p152
      %s154 = ssub.s32 %s30, %s42
      %p155 = scmp.eq.s32.totalorder %s154, 0
      %s157 = sadd.s32 %s156, 1
      %s158 = scalar_select %p155, %s156, %s157
      %p161 = pneg %p155
      %p162 = scmp.eq.s32.totalorder %s23, 7
      %p163 = por %p161, %p162
      %p164 = scmp.ne.s32.totalorder %s156, %s159
      %p165 = scmp.eq.s32.totalorder %s23, 0
      %p166 = por %p164, %p165
      %p167 = scmp.ne.s32.totalorder %s156, %s159
      %p168 = scmp.eq.s32.totalorder %s28, 7
      %p169 = por %p167, %p168
      %p170 = scmp.ne.s32.totalorder %s159, %s160
      %p171 = scmp.eq.s32.totalorder %s28, 0
      %p172 = por %p170, %p171
      %p173 = scmp.ne.s32.totalorder %s159, %s160
      %p174 = scmp.eq.s32.totalorder %s29, 7
      %p175 = por %p173, %p174
      %p177 = scmp.ne.s32.totalorder %s160, %s176
      %p178 = scmp.eq.s32.totalorder %s29, 0
      %p179 = por %p177, %p178
      %s180 = ssub.s32 %s30, %s42
      %s181 = ssub.s32 %s31, %s38
      %s182 = sor.u32 %s180, %s181
      %p183 = scmp.eq.s32.totalorder %s182, 0
      %s185 = sadd.s32 %s184, 1
      %s186 = scalar_select %p183, %s184, %s185
      %p189 = pneg %p183
      %p190 = scmp.eq.s32.totalorder %s23, 7
      %p191 = por %p189, %p190
      %p192 = scmp.ne.s32.totalorder %s184, %s187
      %p193 = scmp.eq.s32.totalorder %s23, 0
      %p194 = por %p192, %p193
      %p195 = scmp.ne.s32.totalorder %s184, %s187
      %p196 = scmp.eq.s32.totalorder %s28, 7
      %p197 = por %p195, %p196
      %p198 = scmp.ne.s32.totalorder %s187, %s188
      %p199 = scmp.eq.s32.totalorder %s28, 0
      %p200 = por %p198, %p199
      %p201 = scmp.ne.s32.totalorder %s187, %s188
      %p202 = scmp.eq.s32.totalorder %s29, 7
      %p203 = por %p201, %p202
      %p205 = scmp.ne.s32.totalorder %s188, %s204
      %p206 = scmp.eq.s32.totalorder %s29, 0
      %p207 = por %p205, %p206
      %s208 = ssub.s32 %s30, %s42
      %s209 = ssub.s32 %s31, %s38
      %s210 = sor.u32 %s208, %s209
      %p211 = scmp.eq.s32.totalorder %s210, 0
      %s213 = sadd.s32 %s212, 1
      %s214 = scalar_select %p211, %s212, %s213
      %p217 = pneg %p211
      %p218 = scmp.eq.s32.totalorder %s23, 7
      %p219 = por %p217, %p218
      %p220 = scmp.ne.s32.totalorder %s212, %s215
      %p221 = scmp.eq.s32.totalorder %s23, 0
      %p222 = por %p220, %p221
      %p223 = scmp.ne.s32.totalorder %s212, %s215
      %p224 = scmp.eq.s32.totalorder %s28, 7
      %p225 = por %p223, %p224
      %p226 = scmp.ne.s32.totalorder %s215, %s216
      %p227 = scmp.eq.s32.totalorder %s28, 0
      %p228 = por %p226, %p227
      %p229 = scmp.ne.s32.totalorder %s215, %s216
      %p230 = scmp.eq.s32.totalorder %s29, 7
      %p231 = por %p229, %p230
      %p233 = scmp.ne.s32.totalorder %s216, %s232
      %p234 = scmp.eq.s32.totalorder %s29, 0
      %p235 = por %p233, %p234
      %s236 = ssub.s32 %s30, %s42
      %s237 = ssub.s32 %s31, %s38
      %s238 = sor.u32 %s236, %s237
      %p239 = scmp.eq.s32.totalorder %s238, 0
      %s241 = sadd.s32 %s240, 1
      %s242 = scalar_select %p239, %s240, %s241
      %p245 = pneg %p239
      %p246 = scmp.eq.s32.totalorder %s23, 7
      %p247 = por %p245, %p246
      %p248 = scmp.ne.s32.totalorder %s240, %s243
      %p249 = scmp.eq.s32.totalorder %s23, 0
      %p250 = por %p248, %p249
      %p251 = scmp.ne.s32.totalorder %s240, %s243
      %p252 = scmp.eq.s32.totalorder %s28, 7
      %p253 = por %p251, %p252
      %p254 = scmp.ne.s32.totalorder %s243, %s244
      %p255 = scmp.eq.s32.totalorder %s28, 0
      %p256 = por %p254, %p255
      %p257 = scmp.ne.s32.totalorder %s243, %s244
      %p258 = scmp.eq.s32.totalorder %s29, 7
      %p259 = por %p257, %p258
      %p261 = scmp.ne.s32.totalorder %s244, %s260
      %p262 = scmp.eq.s32.totalorder %s29, 0
      %p263 = por %p261, %p262
      %p264 = scmp.le.s32.totalorder 1, %s23
      %p265 = scmp.lt.s32.totalorder %s23, 9
      %p266 = pnand %p264, %p265
      %p267 = pneg %p266
      // Predicated region
      $region9: #{tpu_custom_call.1} parent=5 // pred_check
        _
      $region10: #{tpu_custom_call.1} parent=5 // pred_check_branch
        %269 = sbr.rel (%p266) target = $region12
      $region11: #{tpu_custom_call.1} parent=5 // pred_region
        %s270 = ssub.s32 %s23, 1
        // Predicated region
        $region13: #{tpu_custom_call.1} parent=11 // pred_check
          %p271 = pneg %p120
        $region14: #{tpu_custom_call.1} parent=11 // pred_check_branch
          %273 = sbr.rel (%p271) target = $region16
        $region15: #{tpu_custom_call.1} parent=11 // pred_region
          _
        $region16: #{tpu_custom_call.1} parent=11 // pred_fallthru
          _
      $region12: #{tpu_custom_call.1} parent=5 // pred_fallthru
        _
      %p274 = scmp.lt.s32.totalorder %s23, 8
      // Predicated region
      $region17: #{tpu_custom_call.1} parent=5 // pred_check
        %p275 = pneg %p274
      $region18: #{tpu_custom_call.1} parent=5 // pred_check_branch
        %277 = sbr.rel (%p275) target = $region20
      $region19: #{tpu_custom_call.1} parent=5 // pred_region
        // Predicated region
        $region21: #{tpu_custom_call.1} parent=19 // pred_check
          %p278 = pneg %p57
        $region22: #{tpu_custom_call.1} parent=19 // pred_check_branch
          %280 = sbr.rel (%p278) target = $region24
        $region23: #{tpu_custom_call.1} parent=19 // pred_region
          %s281 = smul.u32 2, %s31
          %p282 = scmp.lt.s32.totalorder %s30, 1
          %s283 = scalar_select %p282, %s30, 1
          %p284 = scmp.lt.s32.totalorder %s281, 7
          %s285 = scalar_select %p284, %s281, 7
          %s286 = smul.addr %s283, 8
          %s287 = sadd.s32 %s285, %s286
          %s288 = scalar_lea.vmem %s0, %s287
          %s289 = smul.u32 2, %s31
        $region24: #{tpu_custom_call.1} parent=19 // pred_fallthru
          _
        // Predicated region
        $region25: #{tpu_custom_call.1} parent=19 // pred_check
          %p290 = pneg %p93
        $region26: #{tpu_custom_call.1} parent=19 // pred_check_branch
          %292 = sbr.rel (%p290) target = $region28
        $region27: #{tpu_custom_call.1} parent=19 // pred_region
          %s293 = sadd.s32 %s31, 1
          %s294 = smul.u32 %s293, 2
          %p295 = scmp.lt.s32.totalorder %s294, 7
          %s296 = scalar_select %p295, %s294, 7
          %p297 = scmp.lt.s32.totalorder %s30, 1
          %s298 = scalar_select %p297, %s30, 1
          %p299 = scmp.lt.s32.totalorder %s296, 7
          %s300 = scalar_select %p299, %s296, 7
          %s301 = smul.addr %s298, 8
          %s302 = sadd.s32 %s300, %s301
          %s303 = scalar_lea.vmem %s1, %s302
          %s304 = sadd.s32 %s31, 1
          %s305 = smul.u32 %s304, 2
          %p306 = scmp.lt.s32.totalorder %s305, 7
          %s307 = scalar_select %p306, %s305, 7
        $region28: #{tpu_custom_call.1} parent=19 // pred_fallthru
          _
        // Predicated region
        $region29: #{tpu_custom_call.1} parent=19 // pred_check
          %p308 = pneg %p140
        $region30: #{tpu_custom_call.1} parent=19 // pred_check_branch
          %310 = sbr.rel (%p308) target = $region32
        $region31: #{tpu_custom_call.1} parent=19 // pred_region
          %p311 = scmp.lt.s32.totalorder %s30, 1
          %s312 = scalar_select %p311, %s30, 1
          %s313 = smul.addr %s312, 8
          %s314 = scalar_lea.vmem %s3, %s313
        $region32: #{tpu_custom_call.1} parent=19 // pred_fallthru
          _
        // Predicated region
        $region33: #{tpu_custom_call.1} parent=19 // pred_check
          %p315 = pneg %p166
        $region34: #{tpu_custom_call.1} parent=19 // pred_check_branch
          %317 = sbr.rel (%p315) target = $region36
        $region35: #{tpu_custom_call.1} parent=19 // pred_region
          %p318 = scmp.lt.s32.totalorder %s30, 1
          %s319 = scalar_select %p318, %s30, 1
          %s320 = smul.addr %s319, 8
          %s321 = scalar_lea.vmem %s4, %s320
        $region36: #{tpu_custom_call.1} parent=19 // pred_fallthru
          _
        // Predicated region
        $region37: #{tpu_custom_call.1} parent=19 // pred_check
          %p322 = pneg %p194
        $region38: #{tpu_custom_call.1} parent=19 // pred_check_branch
          %324 = sbr.rel (%p322) target = $region40
        $region39: #{tpu_custom_call.1} parent=19 // pred_region
          %s325 = sand.u32 %s184, 1
          %s326 = scalar_lea.sflag [#allocation4], %s325
          %s327 = sand.u32 %s184, 1
          %s328 = smul.addr %s327, 16
          %s329 = scalar_lea.vmem [#allocation3], %s328
          %s330 = smul.u32 2, %s31
          %s332 = ssub.s32 256, 256
          %333 = vsyncadd %s326, %s332
          %s334 = smul.addr %s30, 8
          %s335 = sadd.s32 %s330, %s334
          %s336 = smul.addr %s335, 128
          %s337 = scalar_lea.hbm %s5, %s336
          %s339 = sshll.u32 %s329, 4
          %s340 = int_to_ptr.vmem [resolvable:$true] %s339
          %342 = dma.hbm_to_vmem [thread:$0]  %s337, 256, %s340, %s326
        $region40: #{tpu_custom_call.1} parent=19 // pred_fallthru
          _
      $region20: #{tpu_custom_call.1} parent=5 // pred_fallthru
        _
      %p343 = scmp.le.s32.totalorder 1, %s23
      %p344 = scmp.lt.s32.totalorder %s23, 9
      %p345 = pnand %p343, %p344
      %p346 = pneg %p345
      // Predicated region
      $region41: #{tpu_custom_call.1} parent=5 // pred_check
        _
      $region42: #{tpu_custom_call.1} parent=5 // pred_check_branch
        %348 = sbr.rel (%p345) target = $region44
      $region43: #{tpu_custom_call.1} parent=5 // pred_region
        %s349 = ssub.s32 %s23, 1
        %s350 = sand.u32 %s187, 1
        %s351 = scalar_lea.sflag [#allocation4], %s350
        %s352 = sand.u32 %s187, 1
        %s353 = smul.addr %s352, 16
        %s354 = scalar_lea.vmem [#allocation3], %s353
        // Predicated region
        $region45: #{tpu_custom_call.1} parent=43 // pred_check
          %p355 = pneg %p200
        $region46: #{tpu_custom_call.1} parent=43 // pred_check_branch
          %357 = sbr.rel (%p355) target = $region48
        $region47: #{tpu_custom_call.1} parent=43 // pred_region
          %358 = dma.done %s351, 256
        $region48: #{tpu_custom_call.1} parent=43 // pred_fallthru
          _
        %s359 = smul.u32 2, %s33
        %p360 = scmp.lt.s32.totalorder %s32, 1
        %s361 = scalar_select %p360, %s32, 1
        %p362 = scmp.lt.s32.totalorder %s359, 7
        %s363 = scalar_select %p362, %s359, 7
        %s364 = smul.addr %s361, 8
        %s365 = sadd.s32 %s363, %s364
        %s366 = scalar_lea.vmem %s0, %s365
        %p367 = pneg %p63
        %p368 = pneg %p60
        %s369 = sadd.s32 %s33, 1
        %s370 = smul.u32 %s369, 2
        %p371 = scmp.lt.s32.totalorder %s370, 7
        %s372 = scalar_select %p371, %s370, 7
        %p373 = scmp.lt.s32.totalorder %s32, 1
        %s374 = scalar_select %p373, %s32, 1
        %p375 = scmp.lt.s32.totalorder %s372, 7
        %s376 = scalar_select %p375, %s372, 7
        %s377 = smul.addr %s374, 8
        %s378 = sadd.s32 %s376, %s377
        %s379 = scalar_lea.vmem %s1, %s378
        %p380 = pneg %p99
        %p381 = pneg %p96
        %p382 = pneg %p120
        %p383 = pneg %p117
        %p384 = scmp.lt.s32.totalorder %s32, 1
        %s385 = scalar_select %p384, %s32, 1
        %s386 = smul.addr %s385, 8
        %s387 = scalar_lea.vmem %s3, %s386
        %p388 = pneg %p146
        %p389 = pneg %p143
        %p390 = scmp.lt.s32.totalorder %s32, 1
        %s391 = scalar_select %p390, %s32, 1
        %s392 = smul.addr %s391, 8
        %s393 = scalar_lea.vmem %s4, %s392
        %p394 = pneg %p172
        %p395 = pneg %p169
        %s396 = sand.u32 %s187, 1
        %s397 = scalar_lea.sflag [#allocation4], %s396
        %s398 = sand.u32 %s187, 1
        %s399 = smul.addr %s398, 16
        %s400 = scalar_lea.vmem [#allocation3], %s399
        %p401 = pneg %p200
        %p402 = pneg %p197
        %p403 = pneg %p228
        %p404 = pneg %p225
        %s405 = sand.u32 %s215, 1
        %s406 = scalar_lea.sflag [#allocation5], %s405
        %s407 = sand.u32 %s215, 1
        %s408 = smul.addr %s407, 16
        %s409 = scalar_lea.vmem [#allocation6], %s408
        %p410 = pneg %p256
        %p411 = pneg %p253
        %s412 = sand.u32 %s243, 1
        %s413 = scalar_lea.sflag [#allocation8], %s412
        %s414 = sand.u32 %s243, 1
        %s415 = smul.addr %s414, 16
        %s416 = scalar_lea.vmem [#allocation7], %s415
        %s417 = smul.u32 2, %s33
        %p418 = scmp.lt.s32.totalorder %s32, 1
        %s419 = scalar_select %p418, %s32, 1
        %p420 = scmp.lt.s32.totalorder %s417, 7
        %s421 = scalar_select %p420, %s417, 7
        %s422 = smul.addr %s419, 8
        %s423 = sadd.s32 %s421, %s422
        %s424 = scalar_lea.vmem %s0, %s423
        %s425 = smul.u32 2, %s33
        %s426 = sadd.s32 %s33, 1
        %s427 = smul.u32 %s426, 2
        %p428 = scmp.lt.s32.totalorder %s427, 7
        %s429 = scalar_select %p428, %s427, 7
        %p430 = scmp.lt.s32.totalorder %s32, 1
        %s431 = scalar_select %p430, %s32, 1
        %p432 = scmp.lt.s32.totalorder %s429, 7
        %s433 = scalar_select %p432, %s429, 7
        %s434 = smul.addr %s431, 8
        %s435 = sadd.s32 %s433, %s434
        %s436 = scalar_lea.vmem %s1, %s435
        %s437 = sadd.s32 %s33, 1
        %s438 = smul.u32 %s437, 2
        %p439 = scmp.lt.s32.totalorder %s438, 7
        %s440 = scalar_select %p439, %s438, 7
        %p441 = scmp.lt.s32.totalorder %s32, 1
        %s442 = scalar_select %p441, %s32, 1
        %s443 = smul.addr %s442, 8
        %s444 = scalar_lea.vmem %s3, %s443
        %p445 = scmp.lt.s32.totalorder %s32, 1
        %s446 = scalar_select %p445, %s32, 1
        %s447 = smul.addr %s446, 8
        %s448 = scalar_lea.vmem %s4, %s447
        %s449 = smul.u32 2, %s33
        %s450 = smul.u32 2, %s33
        %s451 = smul.u32 2, %s33
        %p452 = scmp.eq.s32.totalorder %s33, 0
        // Predicated region
        $region49: #{tpu_custom_call.1} parent=43 // pred_check
          %p453 = pneg %p452
        $region50: #{tpu_custom_call.1} parent=43 // pred_check_branch
          %455 = sbr.rel (%p453) target = $region52
        $region51: #{tpu_custom_call.1} parent=43 // pred_region
          %vm456 = vcmask 7168
          %457 = vst.msk [vmem:[#allocation2] sm:$0xff] %vm456, 0.0
        $region52: #{tpu_custom_call.1} parent=43 // pred_fallthru
          _
        %v458 = vld [vmem:[#allocation2] sm:$0xff]
        %v459 = vld [vmem:[%s444] sm:$0xff]
        %v460 = vld [vmem:[%s2] sm:$0xf]
        %v461 = vlaneseq
        %v462 = vand.u32 %v461, 127
        %v463 = vadd.s32 %v462, 128
        %v464 = vld [vmem:[%s424] sm:$0x3]
        %v466 = vlaneseq
        %v467 = vshrl.u32 %v466, 7
        %v468 = vsub.s32 0, %v467
        %v469 = vrot.slane %v464, %v468
        %v470 = vlaneseq
        %v471 = vshrl.u32 %v470, 7
        %v472 = vsub.s32 1, %v471
        %v473 = vrot.slane %v464, %v472
        %vm476 = vcmp.gt.f32.partialorder %v469, 0.0
        %vm477 = vcmp.gt.f32.partialorder %v473, 0.0
        %v478 = vsel %vm476, 1, 0
        %v479 = vsel %vm477, 1, 0
        %v480 = vcvt.s32.f32 %v478
        %v481 = vcvt.s32.f32 %v479
        %v482 = vmul.f32 %v480, 0.003
        %v483 = vmul.f32 %v481, 0.003
        %v484 = vsub.f32 1.0, %v480
        %v485 = vsub.f32 1.0, %v481
        %v486 = vmul.f32 %v484, 0.033333335
        %v487 = vmul.f32 %v485, 0.033333335
        %v488 = vadd.f32 %v482, %v486
        %v489 = vadd.f32 %v483, %v487
        %v490 = vld [vmem:[%s354] sm:$0xff]
        %v491 = vld [vmem:[%s354 + $0x8] sm:$0xff]
        %v492 = vmul.f32 %v488, %v490
        %v493 = vmul.f32 %v489, %v491
        %494 = vst [vmem:[%s416] sm:$0xff] %v492
        %495 = vst [vmem:[%s416 + $0x8] sm:$0xff] %v493
        %497 = vset.pattern.permute.xlu0 0
        %498 = vperm.xlu0 %497, %v459
        %v499 = vpop.permute.xlu0 %498
        %v501 = vmul.f32 %v469, %v499
        %v502 = vmul.f32 %v473, %v499
        %v503 = vfloor.f32 %v501
        %v504 = vfloor.f32 %v502
        %v505 = vsub.f32 %v501, %v503
        %v506 = vsub.f32 %v502, %v504
        %vm507 = vcmp.eq.s32.totalorder %v462, 0
        %vm508 = vcmp.eq.s32.totalorder %v463, 0
        %s509 = scalar_select %p452, 1, 0
        %v510 = vstv %s509
        %vm511 = vcmp.eq.s32.totalorder %v510, 1
        %vm512 = vmand %vm507, %vm511
        %vm513 = vmand %vm508, %vm511
        %v514 = vsel %vm512, 1.0, 0.0
        %v515 = vsel %vm513, 1.0, 0.0
        %v516 = vld [vmem:[%s448] sm:$0xff]
        %518 = vset.pattern.permute.xlu0 0
        %519 = vperm.xlu0 %518, %v516
        %v520 = vpop.permute.xlu0 %519
        %v522 = vmul.f32 %v520, %v514
        %v523 = vmul.f32 %v520, %v515
        %v524 = vadd.f32 %v505, %v522
        %v525 = vadd.f32 %v506, %v523
        %528 = vrot.lane.b32.xlu0 %v524, 125
        %v529 = vpop.permute.xlu0 %528
        %530 = vrot.lane.b32.xlu0 %v525, 125
        %v531 = vpop.permute.xlu0 %530
        %vm532 = vcmask 1022976
        %v533 = vsel %vm532, %v529, %v531
        %v536 = vsel %vm532, %v531, 0.0
        %v537 = vmul.f32 %v533, 0.5
        %v538 = vmul.f32 %v536, 0.5
        %539 = vrot.lane.b32.xlu0 %v524, 124
        %v540 = vpop.permute.xlu0 %539
        %541 = vrot.lane.b32.xlu0 %v525, 124
        %v542 = vpop.permute.xlu0 %541
        %vm543 = vcmask 1014784
        %v544 = vsel %vm543, %v540, %v542
        %v547 = vsel %vm543, %v542, 0.0
        %v548 = vmul.f32 %v544, 0.5
        %v549 = vmul.f32 %v547, 0.5
        %v550 = vadd.f32 %v537, %v548
        %v551 = vadd.f32 %v538, %v549
        %v553 = vlaneseq
        %v554 = vshrl.u32 %v553, 7
        %v555 = vsub.s32 1, %v554
        %v556 = vrot.slane %v460, %v555
        %v557 = vlaneseq
        %v558 = vshrl.u32 %v557, 7
        %v559 = vsub.s32 3, %v558
        %v560 = vrot.slane %v460, %v559
        %v563 = vlaneseq
        %v564 = vshrl.u32 %v563, 7
        %v565 = vsub.s32 1, %v564
        %v566 = vrot.slane %v556, %v565
        %v567 = vlaneseq
        %v568 = vshrl.u32 %v567, 7
        %v569 = vsub.s32 1, %v568
        %v570 = vrot.slane %v560, %v569
        %v571 = vmul.f32 %v566, %v550
        %v572 = vmul.f32 %v570, %v551
        %575 = vrot.lane.b32.xlu0 %v571, 1
        %v576 = vpop.permute.xlu0 %575
        %577 = vrot.lane.b32.xlu0 %v572, 1
        %v578 = vpop.permute.xlu0 %577
        %vm579 = vcmask 7168
        %v580 = vsel %vm579, %v576, %v578
        %v583 = vsel %vm579, 0.0, %v576
        %v584 = vadd.f32 %v571, %v583
        %v585 = vadd.f32 %v572, %v580
        %588 = vrot.lane.b32.xlu0 %v584, 2
        %v589 = vpop.permute.xlu0 %588
        %590 = vrot.lane.b32.xlu0 %v585, 2
        %v591 = vpop.permute.xlu0 %590
        %vm592 = vcmask 15360
        %v593 = vsel %vm592, %v589, %v591
        %v596 = vsel %vm592, 0.0, %v589
        %v597 = vadd.f32 %v584, %v596
        %v598 = vadd.f32 %v585, %v593
        %601 = vrot.lane.b32.xlu0 %v597, 4
        %v602 = vpop.permute.xlu0 %601
        %603 = vrot.lane.b32.xlu0 %v598, 4
        %v604 = vpop.permute.xlu0 %603
        %vm605 = vcmask 31744
        %v606 = vsel %vm605, %v602, %v604
        %v609 = vsel %vm605, 0.0, %v602
        %v610 = vadd.f32 %v597, %v609
        %v611 = vadd.f32 %v598, %v606
        %614 = vrot.lane.b32.xlu0 %v610, 8
        %v615 = vpop.permute.xlu0 %614
        %616 = vrot.lane.b32.xlu0 %v611, 8
        %v617 = vpop.permute.xlu0 %616
        %vm618 = vcmask 64512
        %v619 = vsel %vm618, %v615, %v617
        %v622 = vsel %vm618, 0.0, %v615
        %v623 = vadd.f32 %v610, %v622
        %v624 = vadd.f32 %v611, %v619
        %627 = vrot.lane.b32.xlu0 %v623, 16
        %v628 = vpop.permute.xlu0 %627
        %629 = vrot.lane.b32.xlu0 %v624, 16
        %v630 = vpop.permute.xlu0 %629
        %vm631 = vcmask 130048
        %v632 = vsel %vm631, %v628, %v630
        %v635 = vsel %vm631, 0.0, %v628
        %v636 = vadd.f32 %v623, %v635
        %v637 = vadd.f32 %v624, %v632
        %640 = vrot.lane.b32.xlu0 %v636, 32
        %v641 = vpop.permute.xlu0 %640
        %642 = vrot.lane.b32.xlu0 %v637, 32
        %v643 = vpop.permute.xlu0 %642
        %vm644 = vcmask 261120
        %v645 = vsel %vm644, %v641, %v643
        %v648 = vsel %vm644, 0.0, %v641
        %v649 = vadd.f32 %v636, %v648
        %v650 = vadd.f32 %v637, %v645
        %653 = vrot.lane.b32.xlu0 %v649, 64
        %v654 = vpop.permute.xlu0 %653
        %655 = vrot.lane.b32.xlu0 %v650, 64
        %v656 = vpop.permute.xlu0 %655
        %vm657 = vcmask 523264
        %v658 = vsel %vm657, %v654, %v656
        %v661 = vsel %vm657, 0.0, %v654
        %v662 = vadd.f32 %v649, %v661
        %v663 = vadd.f32 %v650, %v658
        %v664 = vadd.f32 %v662, 0.0
        %v665 = vadd.f32 %v663, %v662
        %667 = vset.pattern.permute.xlu0 0
        %668 = vperm.xlu0 %667, %v458
        %v669 = vpop.permute.xlu0 %668
        %v671 = vadd.f32 %v664, %v669
        %v672 = vadd.f32 %v665, %v669
        %v673 = vld [vmem:[%s436] sm:$0x1]
        %v675 = vlaneseq
        %v676 = vshrl.u32 %v675, 7
        %v677 = vsub.s32 0, %v676
        %v678 = vrot.slane %v673, %v677
        %680 = vrot.lane.b32.xlu0 %v459, 3
        %v681 = vpop.permute.xlu0 %680
        %v683 = vmul.f32 %v678, %v681
        %v684 = vfloor.f32 %v683
        %v685 = vsub.f32 %v683, %v684
        %v686 = vmul.f32 %v685, 0.5
        %687 = vrot.lane.b32.xlu0 %v459, 4
        %v688 = vpop.permute.xlu0 %687
        %v690 = vmul.f32 %v678, %v688
        %v691 = vfloor.f32 %v690
        %v692 = vsub.f32 %v690, %v691
        %v693 = vmul.f32 %v692, 0.5
        %695 = vrot.lane.b32.xlu0 %v693, 127
        %v696 = vpop.permute.xlu0 %695
        %v698 = vadd.f32 %v686, %v696
        %p699 = scmp.eq.s32.totalorder %s33, 3
        %s700 = scalar_select %p699, 1, 0
        %v701 = vstv %s700
        %vm702 = vcmp.eq.s32.totalorder %v701, 1
        %v703 = vsel %vm702, 0.0, %v698
        %vm704 = vcmp.ge.s32.totalorder %v462, 248
        %vm705 = vcmp.ge.s32.totalorder %v463, 248
        %707 = vset.pattern.permute.xlu0 3
        %708 = vperm.xlu0 %707, %v703
        %v709 = vpop.permute.xlu0 %708
        %v711 = vadd.f32 %v671, %v709
        %v712 = vadd.f32 %v672, %v709
        %715 = vrot.lane.b32.xlu0 %v671, 120
        %v716 = vpop.permute.xlu0 %715
        %717 = vrot.lane.b32.xlu0 %v672, 120
        %v718 = vpop.permute.xlu0 %717
        %vm719 = vcmask 982016
        %v720 = vsel %vm719, %v716, %v718
        %v723 = vsel %vm719, %v718, 0.0
        %v724 = vsel %vm704, 1, 0
        %v725 = vsel %vm705, 1, 0
        %vm726 = vcmp.eq.s32.totalorder %v724, 1
        %vm727 = vcmp.eq.s32.totalorder %v725, 1
        %v728 = vsel %vm726, %v711, %v720
        %v729 = vsel %vm727, %v712, %v723
        %vm730 = vcmp.lt.s32.totalorder %v462, 8
        %vm731 = vcmp.lt.s32.totalorder %v463, 8
        %v732 = vsel %vm511, %v671, %v669
        %v733 = vsel %vm511, %v672, %v669
        %734 = vrot.lane.b32.xlu0 %v671, 8
        %v735 = vpop.permute.xlu0 %734
        %736 = vrot.lane.b32.xlu0 %v672, 8
        %v737 = vpop.permute.xlu0 %736
        %v738 = vsel %vm618, %v735, %v737
        %v741 = vsel %vm618, 0.0, %v735
        %v742 = vsel %vm730, 1, 0
        %v743 = vsel %vm731, 1, 0
        %vm744 = vcmp.eq.s32.totalorder %v742, 1
        %vm745 = vcmp.eq.s32.totalorder %v743, 1
        %v746 = vsel %vm744, %v732, %v741
        %v747 = vsel %vm745, %v733, %v738
        %vm748 = vcmp.ge.f32.partialorder %v460, 0.0
        %v749 = vsub.f32 %v728, %v671
        %v750 = vsub.f32 %v729, %v672
        %v751 = vsub.f32 %v671, %v746
        %v752 = vsub.f32 %v672, %v747
        %v753 = vsel %vm748, 1, 0
        %v754 = vlaneseq
        %v755 = vshrl.u32 %v754, 7
        %v756 = vsub.s32 0, %v755
        %v757 = vrot.slane %v753, %v756
        %v758 = vlaneseq
        %v759 = vshrl.u32 %v758, 7
        %v760 = vsub.s32 2, %v759
        %v761 = vrot.slane %v753, %v760
        %v762 = vlaneseq
        %v763 = vshrl.u32 %v762, 7
        %v764 = vsub.s32 0, %v763
        %v765 = vrot.slane %v757, %v764
        %v766 = vlaneseq
        %v767 = vshrl.u32 %v766, 7
        %v768 = vsub.s32 0, %v767
        %v769 = vrot.slane %v761, %v768
        %vm770 = vcmp.eq.s32.totalorder %v765, 1
        %vm771 = vcmp.eq.s32.totalorder %v769, 1
        %v772 = vsel %vm770, %v749, %v751
        %v773 = vsel %vm771, %v750, %v752
        %v774 = vfloor.f32 %v671
        %v775 = vfloor.f32 %v672
        %v776 = vsub.f32 %v671, %v774
        %v777 = vsub.f32 %v672, %v775
        %v778 = vlaneseq
        %v779 = vshrl.u32 %v778, 7
        %v780 = vsub.s32 0, %v779
        %v781 = vrot.slane %v460, %v780
        %v782 = vlaneseq
        %v783 = vshrl.u32 %v782, 7
        %v784 = vsub.s32 2, %v783
        %v785 = vrot.slane %v460, %v784
        %v788 = vlaneseq
        %v789 = vshrl.u32 %v788, 7
        %v790 = vsub.s32 0, %v789
        %v791 = vrot.slane %v781, %v790
        %v792 = vlaneseq
        %v793 = vshrl.u32 %v792, 7
        %v794 = vsub.s32 0, %v793
        %v795 = vrot.slane %v785, %v794
        %v796 = vmul.f32 %v791, %v772
        %v797 = vmul.f32 %v795, %v773
        %v798 = vadd.f32 %v776, %v796
        %v799 = vadd.f32 %v777, %v797
        %v800 = vmul.f32 %v798, 50.265484
        %v801 = vmul.f32 %v799, 50.265484
        %v802 = vand.u32 2147483647, %v800
        %vm803 = vcmp.le.f32.partialorder %v802, 0.7853982
        %vm804 = vcmp.lt.s32.totalorder %v800, 0
        %v805 = vand.u32 %v800, 2139095040
        %v806 = vshrl.u32 %v805, 23
        %v807 = vsub.s32 %v806, 127
        %v808 = vand.u32 2147483647, %v800
        %v809 = vand.u32 %v808, 8388607
        %v810 = vor.u32 %v809, 8388608
        %v811 = vsub.s32 0, %v810
        %v812 = vadd.s32 %v807, 1
        %vm813 = vcmp.gt.s32.totalorder %v812, 0
        %v814 = vsel %vm813, %v812, 0
        %v815 = vshrl.u32 %v814, 5
        %v816 = vand.u32 %v814, 31
        %v817 = vsub.s32 32, %v816
        %v818 = vshrl.u32 683565275, %v817
        %v819 = vshll.u32 683565275, %v816
        %v820 = vshrl.u32 2475754826, %v817
        %v821 = vor.u32 %v819, %v820
        %v822 = vshll.u32 2475754826, %v816
        %v823 = vshrl.u32 2131351028, %v817
        %v824 = vor.u32 %v822, %v823
        %v825 = vshll.u32 2131351028, %v816
        %v826 = vshrl.u32 2102212464, %v817
        %v827 = vor.u32 %v825, %v826
        %v828 = vshll.u32 2102212464, %v816
        %v829 = vshrl.u32 920167782, %v817
        %v830 = vor.u32 %v828, %v829
        %v831 = vshll.u32 920167782, %v816
        %v832 = vshrl.u32 1326507024, %v817
        %v833 = vor.u32 %v831, %v832
        %vm834 = vcmp.lt.s32.totalorder %v815, 1
        %vm835 = vcmp.lt.s32.totalorder %v815, 2
        %vm836 = vcmp.lt.s32.totalorder %v815, 3
        %vm837 = vcmp.lt.s32.totalorder %v815, 4
        %v838 = vsel %vm834, %v818, %v821
        %v839 = vsel %vm837, %v827, 2102212464
        %v840 = vsel %vm836, %v824, %v839
        %v841 = vsel %vm835, %v838, %v840
        %v842 = vsel %vm834, %v821, %v824
        %v843 = vsel %vm837, %v830, 920167782
        %v844 = vsel %vm836, %v827, %v843
        %v845 = vsel %vm835, %v842, %v844
        %v846 = vsel %vm834, %v824, %v827
        %v847 = vsel %vm837, %v833, 1326507024
        %v848 = vsel %vm836, %v830, %v847
        %v849 = vsel %vm835, %v846, %v848
        %v850 = vshll.u32 %v810, 8
        %v851 = vmul.u32.u64.compose %v850, %v849
        %v852 = vextract.low.u32 %v851
        %v853 = vextract.high.u32 %v851
        %v854 = vmul.u32.u64.compose %v850, %v845
        %v855 = vextract.low.u32 %v854
        %v856 = vextract.high.u32 %v854
        %v857 = vmul.u32 %v850, %v841
        %v858 = vadd.s32 %v853, %v855
        %vm859 = vc.u32 %v853, %v855
        %v860 = vadd.s32 %v856, 1
        %v861 = vsel %vm859, %v860, %v856
        %v862 = vadd.s32 %v857, %v861
        %v863 = vadd.s32 %v862, 536870912
        %v864 = vshrl.u32 %v863, 30
        %v865 = vshll.u32 %v864, 30
        %v866 = vsub.s32 %v862, %v865
        %vm867 = vcmp.lt.s32.totalorder %v866, 0
        %v868 = vsub.s32 0, %v866
        %v869 = vsel %vm867, %v868, %v866
        %v870 = vclz %v869
        %v871 = vsub.s32 %v870, 2
        %vm872 = vcmp.gt.s32.totalorder 0, %v871
        %v873 = vsel %vm872, 0, %v871
        %v874 = vsub.s32 32, %v873
        %v875 = vshll.u32 %v866, %v873
        %v876 = vshrl.u32 %v858, %v874
        %v877 = vor.u32 %v875, %v876
        %v878 = vsub.s32 4294967266, %v873
        %v879 = vadd.s32 %v878, 127
        %v880 = vshll.u32 %v879, 23
        %v881 = vor.u32 4788187, %v880
        %v882 = vand.u32 2147483647, %v881
        %v884 = vcvt.s32.f32 %v877
        %v885 = vmul.f32 %v884, %v882
        %v886 = vxor.u32 %v885, 2147483648
        %v887 = vsel %vm804, %v886, %v885
        %v888 = vsub.s32 4, %v864
        %v889 = vsel %vm804, %v888, %v864
        %v890 = vsel %vm803, %v800, %v887
        %v891 = vsel %vm803, 0, %v889
        %v892 = vcosq.f32.pop %v890
        %v893 = vsinq.f32.pop %v890
        %vm894 = vweird.f32 %v800
        %v895 = vadd.s32 %v891, 3
        %v896 = vand.u32 %v895, 3
        %vm897 = vcmp.lt.s32.totalorder %v896, 2
        %vm898 = vcmp.eq.s32.totalorder %v896, 0
        %v899 = vxor.u32 %v893, 2147483648
        %v900 = vsel %vm898, %v892, %v899
        %vm901 = vcmp.eq.s32.totalorder %v896, 2
        %v902 = vxor.u32 %v892, 2147483648
        %v903 = vsel %vm901, %v902, %v893
        %v904 = vsel %vm897, %v900, %v903
        %v905 = vsel %vm894, nan, %v904
        %v906 = vand.u32 2147483647, %v801
        %vm907 = vcmp.le.f32.partialorder %v906, 0.7853982
        %vm908 = vcmp.lt.s32.totalorder %v801, 0
        %v909 = vand.u32 %v801, 2139095040
        %v910 = vshrl.u32 %v909, 23
        %v911 = vsub.s32 %v910, 127
        %v912 = vand.u32 2147483647, %v801
        %v913 = vand.u32 %v912, 8388607
        %v914 = vor.u32 %v913, 8388608
        %v915 = vsub.s32 0, %v914
        %v916 = vadd.s32 %v911, 1
        %vm917 = vcmp.gt.s32.totalorder %v916, 0
        %v918 = vsel %vm917, %v916, 0
        %v919 = vshrl.u32 %v918, 5
        %v920 = vand.u32 %v918, 31
        %v921 = vsub.s32 32, %v920
        %v922 = vshrl.u32 683565275, %v921
        %v923 = vshll.u32 683565275, %v920
        %v924 = vshrl.u32 2475754826, %v921
        %v925 = vor.u32 %v923, %v924
        %v926 = vshll.u32 2475754826, %v920
        %v927 = vshrl.u32 2131351028, %v921
        %v928 = vor.u32 %v926, %v927
        %v929 = vshll.u32 2131351028, %v920
        %v930 = vshrl.u32 2102212464, %v921
        %v931 = vor.u32 %v929, %v930
        %v932 = vshll.u32 2102212464, %v920
        %v933 = vshrl.u32 920167782, %v921
        %v934 = vor.u32 %v932, %v933
        %v935 = vshll.u32 920167782, %v920
        %v936 = vshrl.u32 1326507024, %v921
        %v937 = vor.u32 %v935, %v936
        %vm938 = vcmp.lt.s32.totalorder %v919, 1
        %vm939 = vcmp.lt.s32.totalorder %v919, 2
        %vm940 = vcmp.lt.s32.totalorder %v919, 3
        %vm941 = vcmp.lt.s32.totalorder %v919, 4
        %v942 = vsel %vm938, %v922, %v925
        %v943 = vsel %vm941, %v931, 2102212464
        %v944 = vsel %vm940, %v928, %v943
        %v945 = vsel %vm939, %v942, %v944
        %v946 = vsel %vm938, %v925, %v928
        %v947 = vsel %vm941, %v934, 920167782
        %v948 = vsel %vm940, %v931, %v947
        %v949 = vsel %vm939, %v946, %v948
        %v950 = vsel %vm938, %v928, %v931
        %v951 = vsel %vm941, %v937, 1326507024
        %v952 = vsel %vm940, %v934, %v951
        %v953 = vsel %vm939, %v950, %v952
        %v954 = vshll.u32 %v914, 8
        %v955 = vmul.u32.u64.compose %v954, %v953
        %v956 = vextract.low.u32 %v955
        %v957 = vextract.high.u32 %v955
        %v958 = vmul.u32.u64.compose %v954, %v949
        %v959 = vextract.low.u32 %v958
        %v960 = vextract.high.u32 %v958
        %v961 = vmul.u32 %v954, %v945
        %v962 = vadd.s32 %v957, %v959
        %vm963 = vc.u32 %v957, %v959
        %v964 = vadd.s32 %v960, 1
        %v965 = vsel %vm963, %v964, %v960
        %v966 = vadd.s32 %v961, %v965
        %v967 = vadd.s32 %v966, 536870912
        %v968 = vshrl.u32 %v967, 30
        %v969 = vshll.u32 %v968, 30
        %v970 = vsub.s32 %v966, %v969
        %vm971 = vcmp.lt.s32.totalorder %v970, 0
        %v972 = vsub.s32 0, %v970
        %v973 = vsel %vm971, %v972, %v970
        %v974 = vclz %v973
        %v975 = vsub.s32 %v974, 2
        %vm976 = vcmp.gt.s32.totalorder 0, %v975
        %v977 = vsel %vm976, 0, %v975
        %v978 = vsub.s32 32, %v977
        %v979 = vshll.u32 %v970, %v977
        %v980 = vshrl.u32 %v962, %v978
        %v981 = vor.u32 %v979, %v980
        %v982 = vsub.s32 4294967266, %v977
        %v983 = vadd.s32 %v982, 127
        %v984 = vshll.u32 %v983, 23
        %v985 = vor.u32 4788187, %v984
        %v986 = vand.u32 2147483647, %v985
        %v988 = vcvt.s32.f32 %v981
        %v989 = vmul.f32 %v988, %v986
        %v990 = vxor.u32 %v989, 2147483648
        %v991 = vsel %vm908, %v990, %v989
        %v992 = vsub.s32 4, %v968
        %v993 = vsel %vm908, %v992, %v968
        %v994 = vsel %vm907, %v801, %v991
        %v995 = vsel %vm907, 0, %v993
        %v996 = vcosq.f32.pop %v994
        %v997 = vsinq.f32.pop %v994
        %vm998 = vweird.f32 %v801
        %v999 = vadd.s32 %v995, 3
        %v1000 = vand.u32 %v999, 3
        %vm1001 = vcmp.lt.s32.totalorder %v1000, 2
        %vm1002 = vcmp.eq.s32.totalorder %v1000, 0
        %v1003 = vxor.u32 %v997, 2147483648
        %v1004 = vsel %vm1002, %v996, %v1003
        %vm1005 = vcmp.eq.s32.totalorder %v1000, 2
        %v1006 = vxor.u32 %v996, 2147483648
        %v1007 = vsel %vm1005, %v1006, %v997
        %v1008 = vsel %vm1001, %v1004, %v1007
        %v1009 = vsel %vm998, nan, %v1008
        %v1010 = vmul.f32 %v905, 0.1
        %v1011 = vmul.f32 %v1009, 0.1
        %1013 = vrot.lane.b32.xlu0 %v777, 1
        %v1014 = vpop.permute.xlu0 %1013
        %1016 = vst.msk [vmem:[#allocation2] sm:$0xff] %vm579, %v1014
        %v1017 = vmul.f32 %v1010, %v480
        %v1018 = vmul.f32 %v1011, %v481
        %v1019 = vld [vmem:[%s416] sm:$0xff]
        %v1020 = vld [vmem:[%s416 + $0x8] sm:$0xff]
        %v1021 = vadd.f32 %v1017, %v1019
        %v1022 = vadd.f32 %v1018, %v1020
        %1023 = vst [vmem:[%s409] sm:$0xff] %v1021
        %1024 = vst [vmem:[%s409 + $0x8] sm:$0xff] %v1022
        %s1025 = sand.u32 %s215, 1
        %s1026 = scalar_lea.sflag [#allocation5], %s1025
        %s1027 = sand.u32 %s215, 1
        %s1028 = smul.addr %s1027, 16
        %s1029 = scalar_lea.vmem [#allocation6], %s1028
        %s1030 = sand.u32 %s243, 1
        %s1031 = scalar_lea.sflag [#allocation8], %s1030
        %s1032 = sand.u32 %s243, 1
        %s1033 = smul.addr %s1032, 16
        %s1034 = scalar_lea.vmem [#allocation7], %s1033
        // Predicated region
        $region53: #{tpu_custom_call.1} parent=43 // pred_check
          %p1035 = pneg %p225
        $region54: #{tpu_custom_call.1} parent=43 // pred_check_branch
          %1037 = sbr.rel (%p1035) target = $region56
        $region55: #{tpu_custom_call.1} parent=43 // pred_region
          %s1038 = smul.u32 2, %s33
          %s1040 = ssub.s32 256, 256
          %1041 = vsyncadd %s1026, %s1040
          %s1042 = smul.addr %s32, 8
          %s1043 = sadd.s32 %s1038, %s1042
          %s1044 = smul.addr %s1043, 128
          %s1045 = scalar_lea.hbm %s6, %s1044
          %s1047 = sshll.u32 %s1029, 4
          %s1048 = int_to_ptr.vmem [resolvable:$true] %s1047
          %1050 = dma.vmem_to_hbm [thread:$0]  %s1048, 256, %s1045, %s1026
        $region56: #{tpu_custom_call.1} parent=43 // pred_fallthru
          _
        // Predicated region
        $region57: #{tpu_custom_call.1} parent=43 // pred_check
          %p1051 = pneg %p253
        $region58: #{tpu_custom_call.1} parent=43 // pred_check_branch
          %1053 = sbr.rel (%p1051) target = $region60
        $region59: #{tpu_custom_call.1} parent=43 // pred_region
          %s1054 = smul.u32 2, %s33
          %s1056 = ssub.s32 256, 256
          %1057 = vsyncadd %s1031, %s1056
          %s1058 = smul.addr %s32, 8
          %s1059 = sadd.s32 %s1054, %s1058
          %s1060 = smul.addr %s1059, 128
          %s1061 = scalar_lea.hbm %s7, %s1060
          %s1063 = sshll.u32 %s1034, 4
          %s1064 = int_to_ptr.vmem [resolvable:$true] %s1063
          %1066 = dma.vmem_to_hbm [thread:$0]  %s1064, 256, %s1061, %s1031
        $region60: #{tpu_custom_call.1} parent=43 // pred_fallthru
          _
      $region44: #{tpu_custom_call.1} parent=5 // pred_fallthru
        _
      %p1067 = scmp.le.s32.totalorder 2, %s23
      // Predicated region
      $region61: #{tpu_custom_call.1} parent=5 // pred_check
        %p1068 = pneg %p1067
      $region62: #{tpu_custom_call.1} parent=5 // pred_check_branch
        %1070 = sbr.rel (%p1068) target = $region64
      $region63: #{tpu_custom_call.1} parent=5 // pred_region
        %s1071 = ssub.s32 %s23, 2
        // Predicated region
        $region65: #{tpu_custom_call.1} parent=63 // pred_check
          %p1072 = pneg %p231
        $region66: #{tpu_custom_call.1} parent=63 // pred_check_branch
          %1074 = sbr.rel (%p1072) target = $region68
        $region67: #{tpu_custom_call.1} parent=63 // pred_region
          %s1075 = sand.u32 %s216, 1
          %s1076 = scalar_lea.sflag [#allocation5], %s1075
          %s1077 = sand.u32 %s216, 1
          %s1078 = smul.addr %s1077, 16
          %s1079 = scalar_lea.vmem [#allocation6], %s1078
          %1080 = dma.done %s1076, 256
        $region68: #{tpu_custom_call.1} parent=63 // pred_fallthru
          _
        // Predicated region
        $region69: #{tpu_custom_call.1} parent=63 // pred_check
          %p1081 = pneg %p259
        $region70: #{tpu_custom_call.1} parent=63 // pred_check_branch
          %1083 = sbr.rel (%p1081) target = $region72
        $region71: #{tpu_custom_call.1} parent=63 // pred_region
          %s1084 = sand.u32 %s244, 1
          %s1085 = scalar_lea.sflag [#allocation8], %s1084
          %s1086 = sand.u32 %s244, 1
          %s1087 = smul.addr %s1086, 16
          %s1088 = scalar_lea.vmem [#allocation7], %s1087
          %1089 = dma.done %s1085, 256
        $region72: #{tpu_custom_call.1} parent=63 // pred_fallthru
          _
      $region64: #{tpu_custom_call.1} parent=5 // pred_fallthru
        _
    $region6: #{tpu_custom_call.1} parent=1 // loop_footer
      %s27 = sadd.s32 1, %s23
    $region7: #{tpu_custom_call.1} parent=1 // loop_footer_branch
      %22 = sbr.rel target = $region3
    $region8: #{tpu_custom_call.1} parent=1 // loop_exit
      _
    %1090 = vsyncpa [#allocation4], 1
    %s1091 = scalar_lea.sflag [#allocation4], 1
    %1092 = vsyncpa %s1091, 1
    %1093 = vsyncpa [#allocation5], 1
    %s1094 = scalar_lea.sflag [#allocation5], 1
    %1095 = vsyncpa %s1094, 1
    %1096 = vsyncpa [#allocation8], 1
    %s1097 = scalar_lea.sflag [#allocation8], 1
    %1098 = vsyncpa %s1097, 1

</llo_original>
